<compile_context>
chip_gen: v5e
topology: v5e:2x2
jax: 0.10.0
libtpu: 0.0.40
codegen_flags: <defaults>
</compile_context>

<pallas_src>
import numpy as np
import jax
import jax.numpy as jnp
from jax import lax
from jax.experimental import pallas as pl
from jax.experimental.pallas import tpu as pltpu

KSIZE = 7
SIGMA = 1.5
RAD = KSIZE // 2


def _gauss_taps(ksize=KSIZE, sigma=SIGMA):
    xs = np.arange(ksize, dtype=np.float64) - (ksize - 1) / 2.0
    wts = np.exp(-(xs ** 2) / (2.0 * sigma ** 2))
    return wts / wts.sum()


def _blur_band(n, ksize=KSIZE, sigma=SIGMA):
    """(n, n) 1-D 'same' zero-pad Gaussian blur operator: y = x @ M."""
    taps = _gauss_taps(ksize, sigma)
    rad = ksize // 2
    m = np.zeros((n, n), dtype=np.float64)
    for i in range(n):
        for j in range(max(0, i - rad), min(n, i + rad + 1)):
            m[i, j] = taps[(i - j) + rad]
    return m


def _temporal_mix(t, c):
    """(t*c, t*c) operator S: agg = S @ blur  <=>  agg[t] = blur[t-1] + blur[t+1]."""
    s = np.zeros((t * c, t * c), dtype=np.float64)
    for ti in range(t):
        for ci in range(c):
            r = ti * c + ci
            if ti > 0:
                s[r, (ti - 1) * c + ci] = 1.0
            if ti < t - 1:
                s[r, (ti + 1) * c + ci] = 1.0
    return s


def _kernel(bop_ref, sop_ref, x_ref, out_ref):
    # bop_ref: (h*w, h*w) spatial blur operator       (VMEM-resident, fetched once)
    # sop_ref: (t*c, t*c) temporal prev+next operator (VMEM-resident, fetched once)
    # x_ref  : (1, t*c, h*w) current batch slab
    x = x_ref[0].astype(jnp.float32)                      # (t*c, h*w)
    blur = jnp.dot(x, bop_ref[...],
                   preferred_element_type=jnp.float32,
                   precision=lax.Precision.HIGHEST)       # (t*c, h*w)  MXU
    agg = jnp.dot(sop_ref[...], blur,
                  preferred_element_type=jnp.float32,
                  precision=lax.Precision.HIGHEST)        # (t*c, h*w)  MXU
    out_ref[0] = (x + agg).astype(out_ref.dtype)


@jax.jit
def temporal_aggregate(x):
    b, t, c, h, w = x.shape
    tc, hw = t * c, h * w

    # Constant operators, built at trace time (baked as f32 constants).
    bop = jnp.asarray(np.kron(_blur_band(h), _blur_band(w)), dtype=jnp.float32)
    sop = jnp.asarray(_temporal_mix(t, c), dtype=jnp.float32)

    # (b, t, c, h, w) -> (b, t*c, h*w): merges adjacent contiguous dims only,
    # so it is a metadata-only reshape (no extra HBM pass), fused under jit.
    xf = x.reshape(b, tc, hw)

    out = pl.pallas_call(
        _kernel,
        out_shape=jax.ShapeDtypeStruct((b, tc, hw), x.dtype),
        grid_spec=pltpu.PrefetchScalarGridSpec(
            num_scalar_prefetch=0,
            grid=(b,),
            in_specs=[
                pl.BlockSpec((hw, hw), lambda i: (0, 0)),       # blur operator
                pl.BlockSpec((tc, tc), lambda i: (0, 0)),       # temporal operator
                pl.BlockSpec((1, tc, hw), lambda i: (i, 0, 0)),  # x slab
            ],
            out_specs=pl.BlockSpec((1, tc, hw), lambda i: (i, 0, 0)),
        ),
        compiler_params=pltpu.CompilerParams(
            dimension_semantics=("parallel",),
            vmem_limit_bytes=32 * 1024 * 1024,
        ),
    )(bop, sop, xf)

    return out.reshape(b, t, c, h, w)


def _reference(x):
    # pure-JAX reference of the same semantics (shifted weighted adds, f32)
    b, t, c, h, w = x.shape
    taps = jnp.asarray(_gauss_taps(), jnp.float32)
    xr = jnp.transpose(x, (0, 2, 1, 3, 4)).reshape(b * c, t, h, w)
    xp = jnp.pad(xr, ((0, 0), (0, 0), (RAD, RAD), (RAD, RAD)))
    bw = sum(taps[k] * xp[:, :, :, k:k + w] for k in range(KSIZE))
    bl = sum(taps[k] * bw[:, :, k:k + h, :] for k in range(KSIZE))
    prev = jnp.concatenate([jnp.zeros_like(bl[:, :1]), bl[:, :-1]], axis=1)
    nxt = jnp.concatenate([bl[:, 1:], jnp.zeros_like(bl[:, :1])], axis=1)
    agg = (prev + nxt).reshape(b, c, t, h, w).transpose(0, 2, 1, 3, 4)
    return x + agg


if __name__ == "__main__":
    key = jax.random.PRNGKey(0)
    b, t, c, h, w = 2, 8, 4, 16, 16
    x = jax.random.normal(key, (b, t, c, h, w), dtype=jnp.float32)

    out = jax.block_until_ready(temporal_aggregate(x))

    ref = _reference(x)
    assert out.shape == (b, t, c, h, w)
    assert jnp.allclose(out, ref, atol=1e-4, rtol=1e-4), "mismatch vs reference"
    print("KERNEL_OK")
</pallas_src>

<mosaic_0001>
module attributes {stable_mosaic.version = 11 : i64} {
  func.func @_kernel(%arg0: i32, %arg1: memref<256x256xf32, #tpu.memory_space<vmem>>, %arg2: memref<32x32xf32, #tpu.memory_space<vmem>>, %arg3: memref<1x32x256xf32, #tpu.memory_space<vmem>>, %arg4: memref<1x32x256xf32, #tpu.memory_space<vmem>>) attributes {dimension_semantics = [#tpu.dimension_semantics<parallel>], iteration_bounds = array<i64: 2>, scalar_prefetch = 0 : i64, scratch_operands = 0 : i64, tpu.core_type = #tpu.core_type<tc>, window_params = [{pipeline_mode = #tpu.pipeline_mode<synchronous>, transform_indices = @transform_0, window_bounds = array<i64: 256, 256>}, {pipeline_mode = #tpu.pipeline_mode<synchronous>, transform_indices = @transform_1, window_bounds = array<i64: 32, 32>}, {transform_indices = @transform_2, window_bounds = array<i64: 1, 32, 256>}, {transform_indices = @transform_3, window_bounds = array<i64: 1, 32, 256>}]} {
    %c0 = arith.constant 0 : index
    %c0_0 = arith.constant 0 : index
    %c0_1 = arith.constant 0 : index
    %0 = vector.load %arg3[%c0, %c0_0, %c0_1] : memref<1x32x256xf32, #tpu.memory_space<vmem>>, vector<1x32x256xf32>
    %1 = vector.shape_cast %0 : vector<1x32x256xf32> to vector<32x256xf32>
    %c0_2 = arith.constant 0 : index
    %c0_3 = arith.constant 0 : index
    %2 = vector.load %arg1[%c0_2, %c0_3] : memref<256x256xf32, #tpu.memory_space<vmem>>, vector<256x256xf32>
    %cst = arith.constant dense<0.000000e+00> : vector<32x256xf32>
    %3 = tpu.matmul %1, %2, %cst {dimension_numbers = #tpu.dot_dimension_numbers<[1], [0], [0], [1], [0, 0, 1, 1], [], []>, precision = #tpu.contract_precision<fp32>} : vector<32x256xf32>, vector<256x256xf32>, vector<32x256xf32> -> vector<32x256xf32>
    %c0_4 = arith.constant 0 : index
    %c0_5 = arith.constant 0 : index
    %4 = vector.load %arg2[%c0_4, %c0_5] : memref<32x32xf32, #tpu.memory_space<vmem>>, vector<32x32xf32>
    %cst_6 = arith.constant dense<0.000000e+00> : vector<32x256xf32>
    %5 = tpu.matmul %4, %3, %cst_6 {dimension_numbers = #tpu.dot_dimension_numbers<[1], [0], [0], [1], [0, 0, 1, 1], [], []>, precision = #tpu.contract_precision<fp32>} : vector<32x32xf32>, vector<32x256xf32>, vector<32x256xf32> -> vector<32x256xf32>
    %6 = arith.addf %1, %5 : vector<32x256xf32>
    %c0_7 = arith.constant 0 : index
    %c0_8 = arith.constant 0 : index
    %c0_9 = arith.constant 0 : index
    %7 = vector.load %arg4[%c0_7, %c0_8, %c0_9] : memref<1x32x256xf32, #tpu.memory_space<vmem>>, vector<1x32x256xf32>
    %8 = vector.shape_cast %7 : vector<1x32x256xf32> to vector<32x256xf32>
    %9 = vector.shape_cast %6 : vector<32x256xf32> to vector<1x32x256xf32>
    tpu.vector_store %arg4[%c0_7, %c0_8, %c0_9], %9 {strides = array<i32>} : memref<1x32x256xf32, #tpu.memory_space<vmem>>, vector<1x32x256xf32>,
    return
  }
  func.func @transform_0(%arg0: i32) -> (i32, i32) {
    %c0_i32 = arith.constant 0 : i32
    %c0_i32_0 = arith.constant 0 : i32
    %c0_i32_1 = arith.constant 0 : i32
    return %c0_i32, %c0_i32_0 : i32, i32
  }
  func.func @transform_1(%arg0: i32) -> (i32, i32) {
    %c0_i32 = arith.constant 0 : i32
    %c0_i32_0 = arith.constant 0 : i32
    %c0_i32_1 = arith.constant 0 : i32
    return %c0_i32, %c0_i32_0 : i32, i32
  }
  func.func @transform_2(%arg0: i32) -> (i32, i32, i32) {
    %c0_i32 = arith.constant 0 : i32
    %c0_i32_0 = arith.constant 0 : i32
    %c0_i32_1 = arith.constant 0 : i32
    return %arg0, %c0_i32, %c0_i32_0 : i32, i32, i32
  }
  func.func @transform_3(%arg0: i32) -> (i32, i32, i32) {
    %c0_i32 = arith.constant 0 : i32
    %c0_i32_0 = arith.constant 0 : i32
    %c0_i32_1 = arith.constant 0 : i32
    return %arg0, %c0_i32, %c0_i32_0 : i32, i32, i32
  }
}

</mosaic_0001>

<llo_original>
// kernel: temporal_aggregate.1
$region0: #{temporal_aggregate.1}
  #allocation0 [shape = 'u32[]', space=smem, size = 0x4, offset = 0x4, fixed_abs, tag = 'smem constant byte address 0x4 - core index']
  #allocation1 [shape = 'u32[72,128]{1,0:T(1,128)}', space=vmem, size = 0x9000, scoped, tag = 'internal scratch']
  %s0 = inlined_call_operand.vmem [shape: f32[256,256], index: 0, kind: input, shape index: {}]
  %s1 = inlined_call_operand.vmem [shape: f32[32,32], index: 1, kind: input, shape index: {}]
  %s2 = inlined_call_operand.vmem [shape: f32[2,32,256], index: 2, kind: input, shape index: {}]
  %s3 = inlined_call_operand.vmem [shape: f32[2,32,256], index: 3, kind: output, shape index: {}]
  %s4 = sld [smem:[#allocation0]]
  $region45: #{temporal_aggregate.1} parent=0
    _
  %s6 = ssub.s32 1, %s4
  %s7 = scalar_select 0, %s6, %s4
  loop: start=0, step=1, limit=4
  $region2: #{temporal_aggregate.1} parent=0 // loop_pre_header
    _
  $region3: #{temporal_aggregate.1} parent=0 // loop_header
    %s9 = sphi 0, %s13
    %p10 = scmp.ge.s32.totalorder %s9, 4
    %s17 = sphi 0, %s17
    %s19 = sphi 0, %s17
    %s20 = sphi 0, %s19
    %s34 = sphi 0, %s20
    %s38 = sphi 0, %s38
    %s40 = sphi 0, %s38
    %s41 = sphi 0, %s40
    %s55 = sphi 0, %s41
    %s61 = sphi 0, %s63
    %s64 = sphi 0, %s61
    %s65 = sphi 0, %s64
    %s81 = sphi 0, %s65
    %s87 = sphi 0, %s89
    %s90 = sphi 0, %s87
    %s91 = sphi 0, %s90
    %s107 = sphi 0, %s91
  $region4: #{temporal_aggregate.1} parent=0 // loop_header_branch
    %12 = sbr.rel (%p10) target = $region8
  $region5: #{temporal_aggregate.1} parent=0 // loop_body
    %s14 = ssub.s32 %s9, 1
    %s15 = ssub.s32 %s9, 2
    %s16 = sadd.s32 %s9, 1
    %s18 = sadd.s32 %s17, 1
    %p21 = scmp.eq.s32.totalorder %s9, 1
    %p22 = scmp.ne.s32.totalorder %s17, %s19
    %p23 = scmp.eq.s32.totalorder %s9, 0
    %p24 = por %p22, %p23
    %p25 = scmp.ne.s32.totalorder %s17, %s19
    %p26 = scmp.eq.s32.totalorder %s14, 1
    %p27 = por %p25, %p26
    %p28 = scmp.ne.s32.totalorder %s19, %s20
    %p29 = scmp.eq.s32.totalorder %s14, 0
    %p30 = por %p28, %p29
    %p31 = scmp.ne.s32.totalorder %s19, %s20
    %p32 = scmp.eq.s32.totalorder %s15, 1
    %p33 = por %p31, %p32
    %p35 = scmp.ne.s32.totalorder %s20, %s34
    %p36 = scmp.eq.s32.totalorder %s15, 0
    %p37 = por %p35, %p36
    %s39 = sadd.s32 %s38, 1
    %p42 = scmp.eq.s32.totalorder %s9, 1
    %p43 = scmp.ne.s32.totalorder %s38, %s40
    %p44 = scmp.eq.s32.totalorder %s9, 0
    %p45 = por %p43, %p44
    %p46 = scmp.ne.s32.totalorder %s38, %s40
    %p47 = scmp.eq.s32.totalorder %s14, 1
    %p48 = por %p46, %p47
    %p49 = scmp.ne.s32.totalorder %s40, %s41
    %p50 = scmp.eq.s32.totalorder %s14, 0
    %p51 = por %p49, %p50
    %p52 = scmp.ne.s32.totalorder %s40, %s41
    %p53 = scmp.eq.s32.totalorder %s15, 1
    %p54 = por %p52, %p53
    %p56 = scmp.ne.s32.totalorder %s41, %s55
    %p57 = scmp.eq.s32.totalorder %s15, 0
    %p58 = por %p56, %p57
    %s59 = ssub.s32 %s9, %s16
    %p60 = scmp.eq.s32.totalorder %s59, 0
    %s62 = sadd.s32 %s61, 1
    %s63 = scalar_select %p60, %s61, %s62
    %p66 = pneg %p60
    %p67 = scmp.eq.s32.totalorder %s9, 1
    %p68 = por %p66, %p67
    %p69 = scmp.ne.s32.totalorder %s61, %s64
    %p70 = scmp.eq.s32.totalorder %s9, 0
    %p71 = por %p69, %p70
    %p72 = scmp.ne.s32.totalorder %s61, %s64
    %p73 = scmp.eq.s32.totalorder %s14, 1
    %p74 = por %p72, %p73
    %p75 = scmp.ne.s32.totalorder %s64, %s65
    %p76 = scmp.eq.s32.totalorder %s14, 0
    %p77 = por %p75, %p76
    %p78 = scmp.ne.s32.totalorder %s64, %s65
    %p79 = scmp.eq.s32.totalorder %s15, 1
    %p80 = por %p78, %p79
    %p82 = scmp.ne.s32.totalorder %s65, %s81
    %p83 = scmp.eq.s32.totalorder %s15, 0
    %p84 = por %p82, %p83
    %s85 = ssub.s32 %s9, %s16
    %p86 = scmp.eq.s32.totalorder %s85, 0
    %s88 = sadd.s32 %s87, 1
    %s89 = scalar_select %p86, %s87, %s88
    %p92 = pneg %p86
    %p93 = scmp.eq.s32.totalorder %s9, 1
    %p94 = por %p92, %p93
    %p95 = scmp.ne.s32.totalorder %s87, %s90
    %p96 = scmp.eq.s32.totalorder %s9, 0
    %p97 = por %p95, %p96
    %p98 = scmp.ne.s32.totalorder %s87, %s90
    %p99 = scmp.eq.s32.totalorder %s14, 1
    %p100 = por %p98, %p99
    %p101 = scmp.ne.s32.totalorder %s90, %s91
    %p102 = scmp.eq.s32.totalorder %s14, 0
    %p103 = por %p101, %p102
    %p104 = scmp.ne.s32.totalorder %s90, %s91
    %p105 = scmp.eq.s32.totalorder %s15, 1
    %p106 = por %p104, %p105
    %p108 = scmp.ne.s32.totalorder %s91, %s107
    %p109 = scmp.eq.s32.totalorder %s15, 0
    %p110 = por %p108, %p109
    %p111 = scmp.le.s32.totalorder 1, %s9
    %p112 = scmp.lt.s32.totalorder %s9, 3
    %p113 = pnand %p111, %p112
    %p114 = pneg %p113
    // Predicated region
    $region9: #{temporal_aggregate.1} parent=5 // pred_check
      _
    $region10: #{temporal_aggregate.1} parent=5 // pred_check_branch
      %116 = sbr.rel (%p113) target = $region12
    $region11: #{temporal_aggregate.1} parent=5 // pred_region
      %s117 = ssub.s32 %s9, 1
      // Predicated region
      $region13: #{temporal_aggregate.1} parent=11 // pred_check
        %p118 = pneg %p30
      $region14: #{temporal_aggregate.1} parent=11 // pred_check_branch
        %120 = sbr.rel (%p118) target = $region16
      $region15: #{temporal_aggregate.1} parent=11 // pred_region
        _
      $region16: #{temporal_aggregate.1} parent=11 // pred_fallthru
        _
      // Predicated region
      $region17: #{temporal_aggregate.1} parent=11 // pred_check
        %p121 = pneg %p51
      $region18: #{temporal_aggregate.1} parent=11 // pred_check_branch
        %123 = sbr.rel (%p121) target = $region20
      $region19: #{temporal_aggregate.1} parent=11 // pred_region
        _
      $region20: #{temporal_aggregate.1} parent=11 // pred_fallthru
        _
    $region12: #{temporal_aggregate.1} parent=5 // pred_fallthru
      _
    %p124 = scmp.lt.s32.totalorder %s9, 2
    // Predicated region
    $region21: #{temporal_aggregate.1} parent=5 // pred_check
      %p125 = pneg %p124
    $region22: #{temporal_aggregate.1} parent=5 // pred_check_branch
      %127 = sbr.rel (%p125) target = $region24
    $region23: #{temporal_aggregate.1} parent=5 // pred_region
      // Predicated region
      $region25: #{temporal_aggregate.1} parent=23 // pred_check
        %p128 = pneg %p71
      $region26: #{temporal_aggregate.1} parent=23 // pred_check_branch
        %130 = sbr.rel (%p128) target = $region28
      $region27: #{temporal_aggregate.1} parent=23 // pred_region
        %p131 = scmp.lt.s32.totalorder %s9, 1
        %s132 = scalar_select %p131, %s9, 1
        %s133 = smul.addr %s132, 8
        %s134 = smul.addr %s133, 8
        %s135 = scalar_lea.vmem %s2, %s134
      $region28: #{temporal_aggregate.1} parent=23 // pred_fallthru
        _
    $region24: #{temporal_aggregate.1} parent=5 // pred_fallthru
      _
    %p136 = scmp.le.s32.totalorder 1, %s9
    %p137 = scmp.lt.s32.totalorder %s9, 3
    %p138 = pnand %p136, %p137
    %p139 = pneg %p138
    // Predicated region
    $region29: #{temporal_aggregate.1} parent=5 // pred_check
      _
    $region30: #{temporal_aggregate.1} parent=5 // pred_check_branch
      %141 = sbr.rel (%p138) target = $region32
    $region31: #{temporal_aggregate.1} parent=5 // pred_region
      %s142 = ssub.s32 %s9, 1
      %p143 = pneg %p30
      %p144 = pneg %p27
      %p145 = pneg %p51
      %p146 = pneg %p48
      %p147 = scmp.lt.s32.totalorder %s14, 1
      %s148 = scalar_select %p147, %s14, 1
      %s149 = smul.addr %s148, 8
      %s150 = smul.addr %s149, 8
      %s151 = scalar_lea.vmem %s2, %s150
      %p152 = pneg %p77
      %p153 = pneg %p74
      %p154 = pneg %p103
      %p155 = pneg %p100
      %p156 = scmp.lt.s32.totalorder %s14, 1
      %s157 = scalar_select %p156, %s14, 1
      %s158 = smul.addr %s157, 8
      %s159 = smul.addr %s158, 8
      %s160 = scalar_lea.vmem %s3, %s159
      %p161 = scmp.lt.s32.totalorder %s14, 1
      %s162 = scalar_select %p161, %s14, 1
      %s163 = smul.addr %s162, 8
      %s164 = smul.addr %s163, 8
      %s165 = scalar_lea.vmem %s2, %s164
      %p166 = scmp.lt.s32.totalorder %s14, 1
      %s167 = scalar_select %p166, %s14, 1
      %s168 = smul.addr %s167, 8
      %s169 = smul.addr %s168, 8
      %s170 = scalar_lea.vmem %s3, %s169
      %v171 = vld [vmem:[%s165] sm:$0xff]
      %v172 = vld [vmem:[%s165 + $0x8] sm:$0xff]
      %v173 = vld [vmem:[%s165 + $0x10] sm:$0xff]
      %v174 = vld [vmem:[%s165 + $0x18] sm:$0xff]
      %v175 = vld [vmem:[%s165 + $0x20] sm:$0xff]
      %v176 = vld [vmem:[%s165 + $0x28] sm:$0xff]
      %v177 = vld [vmem:[%s165 + $0x30] sm:$0xff]
      %v178 = vld [vmem:[%s165 + $0x38] sm:$0xff]
      %v179 = vld [vmem:[%s0] sm:$0xff]
      %v180 = vld [vmem:[%s0 + $0x8] sm:$0xff]
      %v181 = vld [vmem:[%s0 + $0x10] sm:$0xff]
      %v182 = vld [vmem:[%s0 + $0x18] sm:$0xff]
      %v183 = vld [vmem:[%s0 + $0x20] sm:$0xff]
      %v184 = vld [vmem:[%s0 + $0x28] sm:$0xff]
      %v185 = vld [vmem:[%s0 + $0x30] sm:$0xff]
      %v186 = vld [vmem:[%s0 + $0x38] sm:$0xff]
      %v187 = vld [vmem:[%s0 + $0x40] sm:$0xff]
      %v188 = vld [vmem:[%s0 + $0x48] sm:$0xff]
      %v189 = vld [vmem:[%s0 + $0x50] sm:$0xff]
      %v190 = vld [vmem:[%s0 + $0x58] sm:$0xff]
      %v191 = vld [vmem:[%s0 + $0x60] sm:$0xff]
      %v192 = vld [vmem:[%s0 + $0x68] sm:$0xff]
      %v193 = vld [vmem:[%s0 + $0x70] sm:$0xff]
      %v194 = vld [vmem:[%s0 + $0x78] sm:$0xff]
      %v195 = vld [vmem:[%s0 + $0x80] sm:$0xff]
      %v196 = vld [vmem:[%s0 + $0x88] sm:$0xff]
      %v197 = vld [vmem:[%s0 + $0x90] sm:$0xff]
      %v198 = vld [vmem:[%s0 + $0x98] sm:$0xff]
      %v199 = vld [vmem:[%s0 + $0xa0] sm:$0xff]
      %v200 = vld [vmem:[%s0 + $0xa8] sm:$0xff]
      %v201 = vld [vmem:[%s0 + $0xb0] sm:$0xff]
      %v202 = vld [vmem:[%s0 + $0xb8] sm:$0xff]
      %v203 = vld [vmem:[%s0 + $0xc0] sm:$0xff]
      %v204 = vld [vmem:[%s0 + $0xc8] sm:$0xff]
      %v205 = vld [vmem:[%s0 + $0xd0] sm:$0xff]
      %v206 = vld [vmem:[%s0 + $0xd8] sm:$0xff]
      %v207 = vld [vmem:[%s0 + $0xe0] sm:$0xff]
      %v208 = vld [vmem:[%s0 + $0xe8] sm:$0xff]
      %v209 = vld [vmem:[%s0 + $0xf0] sm:$0xff]
      %v210 = vld [vmem:[%s0 + $0xf8] sm:$0xff]
      %v211 = vld [vmem:[%s0 + $0x100] sm:$0xff]
      %v212 = vld [vmem:[%s0 + $0x108] sm:$0xff]
      %v213 = vld [vmem:[%s0 + $0x110] sm:$0xff]
      %v214 = vld [vmem:[%s0 + $0x118] sm:$0xff]
      %v215 = vld [vmem:[%s0 + $0x120] sm:$0xff]
      %v216 = vld [vmem:[%s0 + $0x128] sm:$0xff]
      %v217 = vld [vmem:[%s0 + $0x130] sm:$0xff]
      %v218 = vld [vmem:[%s0 + $0x138] sm:$0xff]
      %v219 = vld [vmem:[%s0 + $0x140] sm:$0xff]
      %v220 = vld [vmem:[%s0 + $0x148] sm:$0xff]
      %v221 = vld [vmem:[%s0 + $0x150] sm:$0xff]
      %v222 = vld [vmem:[%s0 + $0x158] sm:$0xff]
      %v223 = vld [vmem:[%s0 + $0x160] sm:$0xff]
      %v224 = vld [vmem:[%s0 + $0x168] sm:$0xff]
      %v225 = vld [vmem:[%s0 + $0x170] sm:$0xff]
      %v226 = vld [vmem:[%s0 + $0x178] sm:$0xff]
      %v227 = vld [vmem:[%s0 + $0x180] sm:$0xff]
      %v228 = vld [vmem:[%s0 + $0x188] sm:$0xff]
      %v229 = vld [vmem:[%s0 + $0x190] sm:$0xff]
      %v230 = vld [vmem:[%s0 + $0x198] sm:$0xff]
      %v231 = vld [vmem:[%s0 + $0x1a0] sm:$0xff]
      %v232 = vld [vmem:[%s0 + $0x1a8] sm:$0xff]
      %v233 = vld [vmem:[%s0 + $0x1b0] sm:$0xff]
      %v234 = vld [vmem:[%s0 + $0x1b8] sm:$0xff]
      %v235 = vld [vmem:[%s0 + $0x1c0] sm:$0xff]
      %v236 = vld [vmem:[%s0 + $0x1c8] sm:$0xff]
      %v237 = vld [vmem:[%s0 + $0x1d0] sm:$0xff]
      %v238 = vld [vmem:[%s0 + $0x1d8] sm:$0xff]
      %v239 = vld [vmem:[%s0 + $0x1e0] sm:$0xff]
      %v240 = vld [vmem:[%s0 + $0x1e8] sm:$0xff]
      %v241 = vld [vmem:[%s0 + $0x1f0] sm:$0xff]
      %v242 = vld [vmem:[%s0 + $0x1f8] sm:$0xff]
      %v243 = vand.u32 %v209, 4294901760
      %244 = vmatpush.msra.mxu0 %v243
      %v245 = vand.u32 %v207, 4294901760
      %246 = vmatpush.msra.mxu0 %v245
      %v247 = vand.u32 %v205, 4294901760
      %248 = vmatpush.msra.mxu0 %v247
      %v249 = vand.u32 %v203, 4294901760
      %250 = vmatpush.msra.mxu0 %v249
      %v251 = vand.u32 %v201, 4294901760
      %252 = vmatpush.msra.mxu0 %v251
      %v253 = vand.u32 %v199, 4294901760
      %254 = vmatpush.msra.mxu0 %v253
      %v255 = vand.u32 %v197, 4294901760
      %256 = vmatpush.msra.mxu0 %v255
      %v257 = vand.u32 %v195, 4294901760
      %258 = vmatpush.msra.mxu0 %v257
      %v259 = vand.u32 %v193, 4294901760
      %260 = vmatpush.msra.mxu0 %v259
      %v261 = vand.u32 %v191, 4294901760
      %262 = vmatpush.msra.mxu0 %v261
      %v263 = vand.u32 %v189, 4294901760
      %264 = vmatpush.msra.mxu0 %v263
      %v265 = vand.u32 %v187, 4294901760
      %266 = vmatpush.msra.mxu0 %v265
      %v267 = vand.u32 %v185, 4294901760
      %268 = vmatpush.msra.mxu0 %v267
      %v269 = vand.u32 %v183, 4294901760
      %270 = vmatpush.msra.mxu0 %v269
      %v271 = vand.u32 %v181, 4294901760
      %272 = vmatpush.msra.mxu0 %v271
      %v273 = vand.u32 %v179, 4294901760
      %274 = vmatpush.msra.mxu0 %v273
      %v275 = vand.u32 %v171, 4294901760
      %v276 = vsub.f32 %v171, %v275
      %v277 = vand.u32 %v276, 4294901760
      %v278 = vsub.f32 %v276, %v277
      %v279 = vand.u32 %v278, 4294901760
      %280 = vmatmul.f32.gmra.mxu0 %v279
      %v281 = vpop.f32.mrf.mxu0
      %v282 = vadd.f32 0.0, %v281
      %v283 = vand.u32 %v173, 4294901760
      %v284 = vsub.f32 %v173, %v283
      %v285 = vand.u32 %v284, 4294901760
      %v286 = vsub.f32 %v284, %v285
      %v287 = vand.u32 %v286, 4294901760
      %288 = vmatmul.f32.gmra.mxu0 %v287
      %v289 = vpop.f32.mrf.mxu0
      %v290 = vadd.f32 0.0, %v289
      %v291 = vand.u32 %v175, 4294901760
      %v292 = vsub.f32 %v175, %v291
      %v293 = vand.u32 %v292, 4294901760
      %v294 = vsub.f32 %v292, %v293
      %v295 = vand.u32 %v294, 4294901760
      %296 = vmatmul.f32.gmra.mxu0 %v295
      %v297 = vpop.f32.mrf.mxu0
      %v298 = vadd.f32 0.0, %v297
      %v299 = vand.u32 %v177, 4294901760
      %v300 = vsub.f32 %v177, %v299
      %v301 = vand.u32 %v300, 4294901760
      %v302 = vsub.f32 %v300, %v301
      %v303 = vand.u32 %v302, 4294901760
      %304 = vmatmul.f32.gmra.mxu0 %v303
      %v305 = vpop.f32.mrf.mxu0
      %v306 = vadd.f32 0.0, %v305
      %307 = vdwg.mxu0
      %v308 = vand.u32 %v209, 4294901760
      %v309 = vsub.f32 %v209, %v308
      %v310 = vand.u32 %v309, 4294901760
      %v311 = vsub.f32 %v309, %v310
      %v312 = vand.u32 %v311, 4294901760
      %313 = vmatpush.msra.mxu0 %v312
      %v314 = vand.u32 %v207, 4294901760
      %v315 = vsub.f32 %v207, %v314
      %v316 = vand.u32 %v315, 4294901760
      %v317 = vsub.f32 %v315, %v316
      %v318 = vand.u32 %v317, 4294901760
      %319 = vmatpush.msra.mxu0 %v318
      %v320 = vand.u32 %v205, 4294901760
      %v321 = vsub.f32 %v205, %v320
      %v322 = vand.u32 %v321, 4294901760
      %v323 = vsub.f32 %v321, %v322
      %v324 = vand.u32 %v323, 4294901760
      %325 = vmatpush.msra.mxu0 %v324
      %v326 = vand.u32 %v203, 4294901760
      %v327 = vsub.f32 %v203, %v326
      %v328 = vand.u32 %v327, 4294901760
      %v329 = vsub.f32 %v327, %v328
      %v330 = vand.u32 %v329, 4294901760
      %331 = vmatpush.msra.mxu0 %v330
      %v332 = vand.u32 %v201, 4294901760
      %v333 = vsub.f32 %v201, %v332
      %v334 = vand.u32 %v333, 4294901760
      %v335 = vsub.f32 %v333, %v334
      %v336 = vand.u32 %v335, 4294901760
      %337 = vmatpush.msra.mxu0 %v336
      %v338 = vand.u32 %v199, 4294901760
      %v339 = vsub.f32 %v199, %v338
      %v340 = vand.u32 %v339, 4294901760
      %v341 = vsub.f32 %v339, %v340
      %v342 = vand.u32 %v341, 4294901760
      %343 = vmatpush.msra.mxu0 %v342
      %v344 = vand.u32 %v197, 4294901760
      %v345 = vsub.f32 %v197, %v344
      %v346 = vand.u32 %v345, 4294901760
      %v347 = vsub.f32 %v345, %v346
      %v348 = vand.u32 %v347, 4294901760
      %349 = vmatpush.msra.mxu0 %v348
      %v350 = vand.u32 %v195, 4294901760
      %v351 = vsub.f32 %v195, %v350
      %v352 = vand.u32 %v351, 4294901760
      %v353 = vsub.f32 %v351, %v352
      %v354 = vand.u32 %v353, 4294901760
      %355 = vmatpush.msra.mxu0 %v354
      %v356 = vand.u32 %v193, 4294901760
      %v357 = vsub.f32 %v193, %v356
      %v358 = vand.u32 %v357, 4294901760
      %v359 = vsub.f32 %v357, %v358
      %v360 = vand.u32 %v359, 4294901760
      %361 = vmatpush.msra.mxu0 %v360
      %v362 = vand.u32 %v191, 4294901760
      %v363 = vsub.f32 %v191, %v362
      %v364 = vand.u32 %v363, 4294901760
      %v365 = vsub.f32 %v363, %v364
      %v366 = vand.u32 %v365, 4294901760
      %367 = vmatpush.msra.mxu0 %v366
      %v368 = vand.u32 %v189, 4294901760
      %v369 = vsub.f32 %v189, %v368
      %v370 = vand.u32 %v369, 4294901760
      %v371 = vsub.f32 %v369, %v370
      %v372 = vand.u32 %v371, 4294901760
      %373 = vmatpush.msra.mxu0 %v372
      %v374 = vand.u32 %v187, 4294901760
      %v375 = vsub.f32 %v187, %v374
      %v376 = vand.u32 %v375, 4294901760
      %v377 = vsub.f32 %v375, %v376
      %v378 = vand.u32 %v377, 4294901760
      %379 = vmatpush.msra.mxu0 %v378
      %v380 = vand.u32 %v185, 4294901760
      %v381 = vsub.f32 %v185, %v380
      %v382 = vand.u32 %v381, 4294901760
      %v383 = vsub.f32 %v381, %v382
      %v384 = vand.u32 %v383, 4294901760
      %385 = vmatpush.msra.mxu0 %v384
      %v386 = vand.u32 %v183, 4294901760
      %v387 = vsub.f32 %v183, %v386
      %v388 = vand.u32 %v387, 4294901760
      %v389 = vsub.f32 %v387, %v388
      %v390 = vand.u32 %v389, 4294901760
      %391 = vmatpush.msra.mxu0 %v390
      %v392 = vand.u32 %v181, 4294901760
      %v393 = vsub.f32 %v181, %v392
      %v394 = vand.u32 %v393, 4294901760
      %v395 = vsub.f32 %v393, %v394
      %v396 = vand.u32 %v395, 4294901760
      %397 = vmatpush.msra.mxu0 %v396
      %v398 = vand.u32 %v179, 4294901760
      %v399 = vsub.f32 %v179, %v398
      %v400 = vand.u32 %v399, 4294901760
      %v401 = vsub.f32 %v399, %v400
      %v402 = vand.u32 %v401, 4294901760
      %403 = vmatpush.msra.mxu0 %v402
      %v404 = vand.u32 %v171, 4294901760
      %405 = vmatmul.f32.gmra.mxu0 %v404
      %v406 = vpop.f32.mrf.mxu0
      %v407 = vadd.f32 %v282, %v406
      %v408 = vand.u32 %v173, 4294901760
      %409 = vmatmul.f32.gmra.mxu0 %v408
      %v410 = vpop.f32.mrf.mxu0
      %v411 = vadd.f32 %v290, %v410
      %v412 = vand.u32 %v175, 4294901760
      %413 = vmatmul.f32.gmra.mxu0 %v412
      %v414 = vpop.f32.mrf.mxu0
      %v415 = vadd.f32 %v298, %v414
      %v416 = vand.u32 %v177, 4294901760
      %417 = vmatmul.f32.gmra.mxu0 %v416
      %v418 = vpop.f32.mrf.mxu0
      %v419 = vadd.f32 %v306, %v418
      %420 = vdwg.mxu0
      %v421 = vand.u32 %v209, 4294901760
      %v422 = vsub.f32 %v209, %v421
      %423 = vmatpush.msra.mxu0 %v422
      %v424 = vand.u32 %v207, 4294901760
      %v425 = vsub.f32 %v207, %v424
      %426 = vmatpush.msra.mxu0 %v425
      %v427 = vand.u32 %v205, 4294901760
      %v428 = vsub.f32 %v205, %v427
      %429 = vmatpush.msra.mxu0 %v428
      %v430 = vand.u32 %v203, 4294901760
      %v431 = vsub.f32 %v203, %v430
      %432 = vmatpush.msra.mxu0 %v431
      %v433 = vand.u32 %v201, 4294901760
      %v434 = vsub.f32 %v201, %v433
      %435 = vmatpush.msra.mxu0 %v434
      %v436 = vand.u32 %v199, 4294901760
      %v437 = vsub.f32 %v199, %v436
      %438 = vmatpush.msra.mxu0 %v437
      %v439 = vand.u32 %v197, 4294901760
      %v440 = vsub.f32 %v197, %v439
      %441 = vmatpush.msra.mxu0 %v440
      %v442 = vand.u32 %v195, 4294901760
      %v443 = vsub.f32 %v195, %v442
      %444 = vmatpush.msra.mxu0 %v443
      %v445 = vand.u32 %v193, 4294901760
      %v446 = vsub.f32 %v193, %v445
      %447 = vmatpush.msra.mxu0 %v446
      %v448 = vand.u32 %v191, 4294901760
      %v449 = vsub.f32 %v191, %v448
      %450 = vmatpush.msra.mxu0 %v449
      %v451 = vand.u32 %v189, 4294901760
      %v452 = vsub.f32 %v189, %v451
      %453 = vmatpush.msra.mxu0 %v452
      %v454 = vand.u32 %v187, 4294901760
      %v455 = vsub.f32 %v187, %v454
      %456 = vmatpush.msra.mxu0 %v455
      %v457 = vand.u32 %v185, 4294901760
      %v458 = vsub.f32 %v185, %v457
      %459 = vmatpush.msra.mxu0 %v458
      %v460 = vand.u32 %v183, 4294901760
      %v461 = vsub.f32 %v183, %v460
      %462 = vmatpush.msra.mxu0 %v461
      %v463 = vand.u32 %v181, 4294901760
      %v464 = vsub.f32 %v181, %v463
      %465 = vmatpush.msra.mxu0 %v464
      %v466 = vand.u32 %v179, 4294901760
      %v467 = vsub.f32 %v179, %v466
      %468 = vmatpush.msra.mxu0 %v467
      %v469 = vand.u32 %v171, 4294901760
      %v470 = vsub.f32 %v171, %v469
      %471 = vmatmul.f32.gmra.mxu0 %v470
      %v472 = vpop.f32.mrf.mxu0
      %v473 = vadd.f32 %v407, %v472
      %v474 = vand.u32 %v173, 4294901760
      %v475 = vsub.f32 %v173, %v474
      %476 = vmatmul.f32.gmra.mxu0 %v475
      %v477 = vpop.f32.mrf.mxu0
      %v478 = vadd.f32 %v411, %v477
      %v479 = vand.u32 %v175, 4294901760
      %v480 = vsub.f32 %v175, %v479
      %481 = vmatmul.f32.gmra.mxu0 %v480
      %v482 = vpop.f32.mrf.mxu0
      %v483 = vadd.f32 %v415, %v482
      %v484 = vand.u32 %v177, 4294901760
      %v485 = vsub.f32 %v177, %v484
      %486 = vmatmul.f32.gmra.mxu0 %v485
      %v487 = vpop.f32.mrf.mxu0
      %v488 = vadd.f32 %v419, %v487
      %489 = vdwg.mxu0
      %v490 = vand.u32 %v209, 4294901760
      %491 = vmatpush.msra.mxu0 %v490
      %v492 = vand.u32 %v207, 4294901760
      %493 = vmatpush.msra.mxu0 %v492
      %v494 = vand.u32 %v205, 4294901760
      %495 = vmatpush.msra.mxu0 %v494
      %v496 = vand.u32 %v203, 4294901760
      %497 = vmatpush.msra.mxu0 %v496
      %v498 = vand.u32 %v201, 4294901760
      %499 = vmatpush.msra.mxu0 %v498
      %v500 = vand.u32 %v199, 4294901760
      %501 = vmatpush.msra.mxu0 %v500
      %v502 = vand.u32 %v197, 4294901760
      %503 = vmatpush.msra.mxu0 %v502
      %v504 = vand.u32 %v195, 4294901760
      %505 = vmatpush.msra.mxu0 %v504
      %v506 = vand.u32 %v193, 4294901760
      %507 = vmatpush.msra.mxu0 %v506
      %v508 = vand.u32 %v191, 4294901760
      %509 = vmatpush.msra.mxu0 %v508
      %v510 = vand.u32 %v189, 4294901760
      %511 = vmatpush.msra.mxu0 %v510
      %v512 = vand.u32 %v187, 4294901760
      %513 = vmatpush.msra.mxu0 %v512
      %v514 = vand.u32 %v185, 4294901760
      %515 = vmatpush.msra.mxu0 %v514
      %v516 = vand.u32 %v183, 4294901760
      %517 = vmatpush.msra.mxu0 %v516
      %v518 = vand.u32 %v181, 4294901760
      %519 = vmatpush.msra.mxu0 %v518
      %v520 = vand.u32 %v179, 4294901760
      %521 = vmatpush.msra.mxu0 %v520
      %v522 = vand.u32 %v171, 4294901760
      %v523 = vsub.f32 %v171, %v522
      %v524 = vand.u32 %v523, 4294901760
      %525 = vmatmul.f32.gmra.mxu0 %v524
      %v526 = vpop.f32.mrf.mxu0
      %v527 = vadd.f32 %v473, %v526
      %v528 = vand.u32 %v173, 4294901760
      %v529 = vsub.f32 %v173, %v528
      %v530 = vand.u32 %v529, 4294901760
      %531 = vmatmul.f32.gmra.mxu0 %v530
      %v532 = vpop.f32.mrf.mxu0
      %v533 = vadd.f32 %v478, %v532
      %v534 = vand.u32 %v175, 4294901760
      %v535 = vsub.f32 %v175, %v534
      %v536 = vand.u32 %v535, 4294901760
      %537 = vmatmul.f32.gmra.mxu0 %v536
      %v538 = vpop.f32.mrf.mxu0
      %v539 = vadd.f32 %v483, %v538
      %v540 = vand.u32 %v177, 4294901760
      %v541 = vsub.f32 %v177, %v540
      %v542 = vand.u32 %v541, 4294901760
      %543 = vmatmul.f32.gmra.mxu0 %v542
      %v544 = vpop.f32.mrf.mxu0
      %v545 = vadd.f32 %v488, %v544
      %546 = vdwg.mxu0
      %v547 = vand.u32 %v209, 4294901760
      %v548 = vsub.f32 %v209, %v547
      %v549 = vand.u32 %v548, 4294901760
      %550 = vmatpush.msra.mxu0 %v549
      %v551 = vand.u32 %v207, 4294901760
      %v552 = vsub.f32 %v207, %v551
      %v553 = vand.u32 %v552, 4294901760
      %554 = vmatpush.msra.mxu0 %v553
      %v555 = vand.u32 %v205, 4294901760
      %v556 = vsub.f32 %v205, %v555
      %v557 = vand.u32 %v556, 4294901760
      %558 = vmatpush.msra.mxu0 %v557
      %v559 = vand.u32 %v203, 4294901760
      %v560 = vsub.f32 %v203, %v559
      %v561 = vand.u32 %v560, 4294901760
      %562 = vmatpush.msra.mxu0 %v561
      %v563 = vand.u32 %v201, 4294901760
      %v564 = vsub.f32 %v201, %v563
      %v565 = vand.u32 %v564, 4294901760
      %566 = vmatpush.msra.mxu0 %v565
      %v567 = vand.u32 %v199, 4294901760
      %v568 = vsub.f32 %v199, %v567
      %v569 = vand.u32 %v568, 4294901760
      %570 = vmatpush.msra.mxu0 %v569
      %v571 = vand.u32 %v197, 4294901760
      %v572 = vsub.f32 %v197, %v571
      %v573 = vand.u32 %v572, 4294901760
      %574 = vmatpush.msra.mxu0 %v573
      %v575 = vand.u32 %v195, 4294901760
      %v576 = vsub.f32 %v195, %v575
      %v577 = vand.u32 %v576, 4294901760
      %578 = vmatpush.msra.mxu0 %v577
      %v579 = vand.u32 %v193, 4294901760
      %v580 = vsub.f32 %v193, %v579
      %v581 = vand.u32 %v580, 4294901760
      %582 = vmatpush.msra.mxu0 %v581
      %v583 = vand.u32 %v191, 4294901760
      %v584 = vsub.f32 %v191, %v583
      %v585 = vand.u32 %v584, 4294901760
      %586 = vmatpush.msra.mxu0 %v585
      %v587 = vand.u32 %v189, 4294901760
      %v588 = vsub.f32 %v189, %v587
      %v589 = vand.u32 %v588, 4294901760
      %590 = vmatpush.msra.mxu0 %v589
      %v591 = vand.u32 %v187, 4294901760
      %v592 = vsub.f32 %v187, %v591
      %v593 = vand.u32 %v592, 4294901760
      %594 = vmatpush.msra.mxu0 %v593
      %v595 = vand.u32 %v185, 4294901760
      %v596 = vsub.f32 %v185, %v595
      %v597 = vand.u32 %v596, 4294901760
      %598 = vmatpush.msra.mxu0 %v597
      %v599 = vand.u32 %v183, 4294901760
      %v600 = vsub.f32 %v183, %v599
      %v601 = vand.u32 %v600, 4294901760
      %602 = vmatpush.msra.mxu0 %v601
      %v603 = vand.u32 %v181, 4294901760
      %v604 = vsub.f32 %v181, %v603
      %v605 = vand.u32 %v604, 4294901760
      %606 = vmatpush.msra.mxu0 %v605
      %v607 = vand.u32 %v179, 4294901760
      %v608 = vsub.f32 %v179, %v607
      %v609 = vand.u32 %v608, 4294901760
      %610 = vmatpush.msra.mxu0 %v609
      %v611 = vand.u32 %v171, 4294901760
      %612 = vmatmul.f32.gmra.mxu0 %v611
      %v613 = vpop.f32.mrf.mxu0
      %v614 = vadd.f32 %v527, %v613
      %v615 = vand.u32 %v173, 4294901760
      %616 = vmatmul.f32.gmra.mxu0 %v615
      %v617 = vpop.f32.mrf.mxu0
      %v618 = vadd.f32 %v533, %v617
      %v619 = vand.u32 %v175, 4294901760
      %620 = vmatmul.f32.gmra.mxu0 %v619
      %v621 = vpop.f32.mrf.mxu0
      %v622 = vadd.f32 %v539, %v621
      %v623 = vand.u32 %v177, 4294901760
      %624 = vmatmul.f32.gmra.mxu0 %v623
      %v625 = vpop.f32.mrf.mxu0
      %v626 = vadd.f32 %v545, %v625
      %627 = vdwg.mxu0
      %v628 = vand.u32 %v209, 4294901760
      %629 = vmatpush.msra.mxu0 %v628
      %v630 = vand.u32 %v207, 4294901760
      %631 = vmatpush.msra.mxu0 %v630
      %v632 = vand.u32 %v205, 4294901760
      %633 = vmatpush.msra.mxu0 %v632
      %v634 = vand.u32 %v203, 4294901760
      %635 = vmatpush.msra.mxu0 %v634
      %v636 = vand.u32 %v201, 4294901760
      %637 = vmatpush.msra.mxu0 %v636
      %v638 = vand.u32 %v199, 4294901760
      %639 = vmatpush.msra.mxu0 %v638
      %v640 = vand.u32 %v197, 4294901760
      %641 = vmatpush.msra.mxu0 %v640
      %v642 = vand.u32 %v195, 4294901760
      %643 = vmatpush.msra.mxu0 %v642
      %v644 = vand.u32 %v193, 4294901760
      %645 = vmatpush.msra.mxu0 %v644
      %v646 = vand.u32 %v191, 4294901760
      %647 = vmatpush.msra.mxu0 %v646
      %v648 = vand.u32 %v189, 4294901760
      %649 = vmatpush.msra.mxu0 %v648
      %v650 = vand.u32 %v187, 4294901760
      %651 = vmatpush.msra.mxu0 %v650
      %v652 = vand.u32 %v185, 4294901760
      %653 = vmatpush.msra.mxu0 %v652
      %v654 = vand.u32 %v183, 4294901760
      %655 = vmatpush.msra.mxu0 %v654
      %v656 = vand.u32 %v181, 4294901760
      %657 = vmatpush.msra.mxu0 %v656
      %v658 = vand.u32 %v179, 4294901760
      %659 = vmatpush.msra.mxu0 %v658
      %v660 = vand.u32 %v171, 4294901760
      %661 = vmatmul.f32.gmra.mxu0 %v660
      %v662 = vpop.f32.mrf.mxu0
      %v663 = vadd.f32 %v614, %v662
      %v664 = vand.u32 %v173, 4294901760
      %665 = vmatmul.f32.gmra.mxu0 %v664
      %v666 = vpop.f32.mrf.mxu0
      %v667 = vadd.f32 %v618, %v666
      %v668 = vand.u32 %v175, 4294901760
      %669 = vmatmul.f32.gmra.mxu0 %v668
      %v670 = vpop.f32.mrf.mxu0
      %v671 = vadd.f32 %v622, %v670
      %v672 = vand.u32 %v177, 4294901760
      %673 = vmatmul.f32.gmra.mxu0 %v672
      %v674 = vpop.f32.mrf.mxu0
      %v675 = vadd.f32 %v626, %v674
      %676 = vdwg.mxu0
      %v677 = vand.u32 %v241, 4294901760
      %678 = vmatpush.msra.mxu0 %v677
      %v679 = vand.u32 %v239, 4294901760
      %680 = vmatpush.msra.mxu0 %v679
      %v681 = vand.u32 %v237, 4294901760
      %682 = vmatpush.msra.mxu0 %v681
      %v683 = vand.u32 %v235, 4294901760
      %684 = vmatpush.msra.mxu0 %v683
      %v685 = vand.u32 %v233, 4294901760
      %686 = vmatpush.msra.mxu0 %v685
      %v687 = vand.u32 %v231, 4294901760
      %688 = vmatpush.msra.mxu0 %v687
      %v689 = vand.u32 %v229, 4294901760
      %690 = vmatpush.msra.mxu0 %v689
      %v691 = vand.u32 %v227, 4294901760
      %692 = vmatpush.msra.mxu0 %v691
      %v693 = vand.u32 %v225, 4294901760
      %694 = vmatpush.msra.mxu0 %v693
      %v695 = vand.u32 %v223, 4294901760
      %696 = vmatpush.msra.mxu0 %v695
      %v697 = vand.u32 %v221, 4294901760
      %698 = vmatpush.msra.mxu0 %v697
      %v699 = vand.u32 %v219, 4294901760
      %700 = vmatpush.msra.mxu0 %v699
      %v701 = vand.u32 %v217, 4294901760
      %702 = vmatpush.msra.mxu0 %v701
      %v703 = vand.u32 %v215, 4294901760
      %704 = vmatpush.msra.mxu0 %v703
      %v705 = vand.u32 %v213, 4294901760
      %706 = vmatpush.msra.mxu0 %v705
      %v707 = vand.u32 %v211, 4294901760
      %708 = vmatpush.msra.mxu0 %v707
      %v709 = vand.u32 %v172, 4294901760
      %v710 = vsub.f32 %v172, %v709
      %v711 = vand.u32 %v710, 4294901760
      %v712 = vsub.f32 %v710, %v711
      %v713 = vand.u32 %v712, 4294901760
      %714 = vmatmul.f32.gmra.mxu0 %v713
      %v715 = vpop.f32.mrf.mxu0
      %v716 = vadd.f32 %v663, %v715
      %v717 = vand.u32 %v174, 4294901760
      %v718 = vsub.f32 %v174, %v717
      %v719 = vand.u32 %v718, 4294901760
      %v720 = vsub.f32 %v718, %v719
      %v721 = vand.u32 %v720, 4294901760
      %722 = vmatmul.f32.gmra.mxu0 %v721
      %v723 = vpop.f32.mrf.mxu0
      %v724 = vadd.f32 %v667, %v723
      %v725 = vand.u32 %v176, 4294901760
      %v726 = vsub.f32 %v176, %v725
      %v727 = vand.u32 %v726, 4294901760
      %v728 = vsub.f32 %v726, %v727
      %v729 = vand.u32 %v728, 4294901760
      %730 = vmatmul.f32.gmra.mxu0 %v729
      %v731 = vpop.f32.mrf.mxu0
      %v732 = vadd.f32 %v671, %v731
      %v733 = vand.u32 %v178, 4294901760
      %v734 = vsub.f32 %v178, %v733
      %v735 = vand.u32 %v734, 4294901760
      %v736 = vsub.f32 %v734, %v735
      %v737 = vand.u32 %v736, 4294901760
      %738 = vmatmul.f32.gmra.mxu0 %v737
      %v739 = vpop.f32.mrf.mxu0
      %v740 = vadd.f32 %v675, %v739
      %741 = vdwg.mxu0
      %v742 = vand.u32 %v241, 4294901760
      %v743 = vsub.f32 %v241, %v742
      %v744 = vand.u32 %v743, 4294901760
      %v745 = vsub.f32 %v743, %v744
      %v746 = vand.u32 %v745, 4294901760
      %747 = vmatpush.msra.mxu0 %v746
      %v748 = vand.u32 %v239, 4294901760
      %v749 = vsub.f32 %v239, %v748
      %v750 = vand.u32 %v749, 4294901760
      %v751 = vsub.f32 %v749, %v750
      %v752 = vand.u32 %v751, 4294901760
      %753 = vmatpush.msra.mxu0 %v752
      %v754 = vand.u32 %v237, 4294901760
      %v755 = vsub.f32 %v237, %v754
      %v756 = vand.u32 %v755, 4294901760
      %v757 = vsub.f32 %v755, %v756
      %v758 = vand.u32 %v757, 4294901760
      %759 = vmatpush.msra.mxu0 %v758
      %v760 = vand.u32 %v235, 4294901760
      %v761 = vsub.f32 %v235, %v760
      %v762 = vand.u32 %v761, 4294901760
      %v763 = vsub.f32 %v761, %v762
      %v764 = vand.u32 %v763, 4294901760
      %765 = vmatpush.msra.mxu0 %v764
      %v766 = vand.u32 %v233, 4294901760
      %v767 = vsub.f32 %v233, %v766
      %v768 = vand.u32 %v767, 4294901760
      %v769 = vsub.f32 %v767, %v768
      %v770 = vand.u32 %v769, 4294901760
      %771 = vmatpush.msra.mxu0 %v770
      %v772 = vand.u32 %v231, 4294901760
      %v773 = vsub.f32 %v231, %v772
      %v774 = vand.u32 %v773, 4294901760
      %v775 = vsub.f32 %v773, %v774
      %v776 = vand.u32 %v775, 4294901760
      %777 = vmatpush.msra.mxu0 %v776
      %v778 = vand.u32 %v229, 4294901760
      %v779 = vsub.f32 %v229, %v778
      %v780 = vand.u32 %v779, 4294901760
      %v781 = vsub.f32 %v779, %v780
      %v782 = vand.u32 %v781, 4294901760
      %783 = vmatpush.msra.mxu0 %v782
      %v784 = vand.u32 %v227, 4294901760
      %v785 = vsub.f32 %v227, %v784
      %v786 = vand.u32 %v785, 4294901760
      %v787 = vsub.f32 %v785, %v786
      %v788 = vand.u32 %v787, 4294901760
      %789 = vmatpush.msra.mxu0 %v788
      %v790 = vand.u32 %v225, 4294901760
      %v791 = vsub.f32 %v225, %v790
      %v792 = vand.u32 %v791, 4294901760
      %v793 = vsub.f32 %v791, %v792
      %v794 = vand.u32 %v793, 4294901760
      %795 = vmatpush.msra.mxu0 %v794
      %v796 = vand.u32 %v223, 4294901760
      %v797 = vsub.f32 %v223, %v796
      %v798 = vand.u32 %v797, 4294901760
      %v799 = vsub.f32 %v797, %v798
      %v800 = vand.u32 %v799, 4294901760
      %801 = vmatpush.msra.mxu0 %v800
      %v802 = vand.u32 %v221, 4294901760
      %v803 = vsub.f32 %v221, %v802
      %v804 = vand.u32 %v803, 4294901760
      %v805 = vsub.f32 %v803, %v804
      %v806 = vand.u32 %v805, 4294901760
      %807 = vmatpush.msra.mxu0 %v806
      %v808 = vand.u32 %v219, 4294901760
      %v809 = vsub.f32 %v219, %v808
      %v810 = vand.u32 %v809, 4294901760
      %v811 = vsub.f32 %v809, %v810
      %v812 = vand.u32 %v811, 4294901760
      %813 = vmatpush.msra.mxu0 %v812
      %v814 = vand.u32 %v217, 4294901760
      %v815 = vsub.f32 %v217, %v814
      %v816 = vand.u32 %v815, 4294901760
      %v817 = vsub.f32 %v815, %v816
      %v818 = vand.u32 %v817, 4294901760
      %819 = vmatpush.msra.mxu0 %v818
      %v820 = vand.u32 %v215, 4294901760
      %v821 = vsub.f32 %v215, %v820
      %v822 = vand.u32 %v821, 4294901760
      %v823 = vsub.f32 %v821, %v822
      %v824 = vand.u32 %v823, 4294901760
      %825 = vmatpush.msra.mxu0 %v824
      %v826 = vand.u32 %v213, 4294901760
      %v827 = vsub.f32 %v213, %v826
      %v828 = vand.u32 %v827, 4294901760
      %v829 = vsub.f32 %v827, %v828
      %v830 = vand.u32 %v829, 4294901760
      %831 = vmatpush.msra.mxu0 %v830
      %v832 = vand.u32 %v211, 4294901760
      %v833 = vsub.f32 %v211, %v832
      %v834 = vand.u32 %v833, 4294901760
      %v835 = vsub.f32 %v833, %v834
      %v836 = vand.u32 %v835, 4294901760
      %837 = vmatpush.msra.mxu0 %v836
      %v838 = vand.u32 %v172, 4294901760
      %839 = vmatmul.f32.gmra.mxu0 %v838
      %v840 = vpop.f32.mrf.mxu0
      %v841 = vadd.f32 %v716, %v840
      %v842 = vand.u32 %v174, 4294901760
      %843 = vmatmul.f32.gmra.mxu0 %v842
      %v844 = vpop.f32.mrf.mxu0
      %v845 = vadd.f32 %v724, %v844
      %v846 = vand.u32 %v176, 4294901760
      %847 = vmatmul.f32.gmra.mxu0 %v846
      %v848 = vpop.f32.mrf.mxu0
      %v849 = vadd.f32 %v732, %v848
      %v850 = vand.u32 %v178, 4294901760
      %851 = vmatmul.f32.gmra.mxu0 %v850
      %v852 = vpop.f32.mrf.mxu0
      %v853 = vadd.f32 %v740, %v852
      %854 = vdwg.mxu0
      %v855 = vand.u32 %v241, 4294901760
      %v856 = vsub.f32 %v241, %v855
      %857 = vmatpush.msra.mxu0 %v856
      %v858 = vand.u32 %v239, 4294901760
      %v859 = vsub.f32 %v239, %v858
      %860 = vmatpush.msra.mxu0 %v859
      %v861 = vand.u32 %v237, 4294901760
      %v862 = vsub.f32 %v237, %v861
      %863 = vmatpush.msra.mxu0 %v862
      %v864 = vand.u32 %v235, 4294901760
      %v865 = vsub.f32 %v235, %v864
      %866 = vmatpush.msra.mxu0 %v865
      %v867 = vand.u32 %v233, 4294901760
      %v868 = vsub.f32 %v233, %v867
      %869 = vmatpush.msra.mxu0 %v868
      %v870 = vand.u32 %v231, 4294901760
      %v871 = vsub.f32 %v231, %v870
      %872 = vmatpush.msra.mxu0 %v871
      %v873 = vand.u32 %v229, 4294901760
      %v874 = vsub.f32 %v229, %v873
      %875 = vmatpush.msra.mxu0 %v874
      %v876 = vand.u32 %v227, 4294901760
      %v877 = vsub.f32 %v227, %v876
      %878 = vmatpush.msra.mxu0 %v877
      %v879 = vand.u32 %v225, 4294901760
      %v880 = vsub.f32 %v225, %v879
      %881 = vmatpush.msra.mxu0 %v880
      %v882 = vand.u32 %v223, 4294901760
      %v883 = vsub.f32 %v223, %v882
      %884 = vmatpush.msra.mxu0 %v883
      %v885 = vand.u32 %v221, 4294901760
      %v886 = vsub.f32 %v221, %v885
      %887 = vmatpush.msra.mxu0 %v886
      %v888 = vand.u32 %v219, 4294901760
      %v889 = vsub.f32 %v219, %v888
      %890 = vmatpush.msra.mxu0 %v889
      %v891 = vand.u32 %v217, 4294901760
      %v892 = vsub.f32 %v217, %v891
      %893 = vmatpush.msra.mxu0 %v892
      %v894 = vand.u32 %v215, 4294901760
      %v895 = vsub.f32 %v215, %v894
      %896 = vmatpush.msra.mxu0 %v895
      %v897 = vand.u32 %v213, 4294901760
      %v898 = vsub.f32 %v213, %v897
      %899 = vmatpush.msra.mxu0 %v898
      %v900 = vand.u32 %v211, 4294901760
      %v901 = vsub.f32 %v211, %v900
      %902 = vmatpush.msra.mxu0 %v901
      %v903 = vand.u32 %v172, 4294901760
      %v904 = vsub.f32 %v172, %v903
      %905 = vmatmul.f32.gmra.mxu0 %v904
      %v906 = vpop.f32.mrf.mxu0
      %v907 = vadd.f32 %v841, %v906
      %v908 = vand.u32 %v174, 4294901760
      %v909 = vsub.f32 %v174, %v908
      %910 = vmatmul.f32.gmra.mxu0 %v909
      %v911 = vpop.f32.mrf.mxu0
      %v912 = vadd.f32 %v845, %v911
      %v913 = vand.u32 %v176, 4294901760
      %v914 = vsub.f32 %v176, %v913
      %915 = vmatmul.f32.gmra.mxu0 %v914
      %v916 = vpop.f32.mrf.mxu0
      %v917 = vadd.f32 %v849, %v916
      %v918 = vand.u32 %v178, 4294901760
      %v919 = vsub.f32 %v178, %v918
      %920 = vmatmul.f32.gmra.mxu0 %v919
      %v921 = vpop.f32.mrf.mxu0
      %v922 = vadd.f32 %v853, %v921
      %923 = vdwg.mxu0
      %v924 = vand.u32 %v241, 4294901760
      %925 = vmatpush.msra.mxu0 %v924
      %v926 = vand.u32 %v239, 4294901760
      %927 = vmatpush.msra.mxu0 %v926
      %v928 = vand.u32 %v237, 4294901760
      %929 = vmatpush.msra.mxu0 %v928
      %v930 = vand.u32 %v235, 4294901760
      %931 = vmatpush.msra.mxu0 %v930
      %v932 = vand.u32 %v233, 4294901760
      %933 = vmatpush.msra.mxu0 %v932
      %v934 = vand.u32 %v231, 4294901760
      %935 = vmatpush.msra.mxu0 %v934
      %v936 = vand.u32 %v229, 4294901760
      %937 = vmatpush.msra.mxu0 %v936
      %v938 = vand.u32 %v227, 4294901760
      %939 = vmatpush.msra.mxu0 %v938
      %v940 = vand.u32 %v225, 4294901760
      %941 = vmatpush.msra.mxu0 %v940
      %v942 = vand.u32 %v223, 4294901760
      %943 = vmatpush.msra.mxu0 %v942
      %v944 = vand.u32 %v221, 4294901760
      %945 = vmatpush.msra.mxu0 %v944
      %v946 = vand.u32 %v219, 4294901760
      %947 = vmatpush.msra.mxu0 %v946
      %v948 = vand.u32 %v217, 4294901760
      %949 = vmatpush.msra.mxu0 %v948
      %v950 = vand.u32 %v215, 4294901760
      %951 = vmatpush.msra.mxu0 %v950
      %v952 = vand.u32 %v213, 4294901760
      %953 = vmatpush.msra.mxu0 %v952
      %v954 = vand.u32 %v211, 4294901760
      %955 = vmatpush.msra.mxu0 %v954
      %v956 = vand.u32 %v172, 4294901760
      %v957 = vsub.f32 %v172, %v956
      %v958 = vand.u32 %v957, 4294901760
      %959 = vmatmul.f32.gmra.mxu0 %v958
      %v960 = vpop.f32.mrf.mxu0
      %v961 = vadd.f32 %v907, %v960
      %v962 = vand.u32 %v174, 4294901760
      %v963 = vsub.f32 %v174, %v962
      %v964 = vand.u32 %v963, 4294901760
      %965 = vmatmul.f32.gmra.mxu0 %v964
      %v966 = vpop.f32.mrf.mxu0
      %v967 = vadd.f32 %v912, %v966
      %v968 = vand.u32 %v176, 4294901760
      %v969 = vsub.f32 %v176, %v968
      %v970 = vand.u32 %v969, 4294901760
      %971 = vmatmul.f32.gmra.mxu0 %v970
      %v972 = vpop.f32.mrf.mxu0
      %v973 = vadd.f32 %v917, %v972
      %v974 = vand.u32 %v178, 4294901760
      %v975 = vsub.f32 %v178, %v974
      %v976 = vand.u32 %v975, 4294901760
      %977 = vmatmul.f32.gmra.mxu0 %v976
      %v978 = vpop.f32.mrf.mxu0
      %v979 = vadd.f32 %v922, %v978
      %980 = vdwg.mxu0
      %v981 = vand.u32 %v241, 4294901760
      %v982 = vsub.f32 %v241, %v981
      %v983 = vand.u32 %v982, 4294901760
      %984 = vmatpush.msra.mxu0 %v983
      %v985 = vand.u32 %v239, 4294901760
      %v986 = vsub.f32 %v239, %v985
      %v987 = vand.u32 %v986, 4294901760
      %988 = vmatpush.msra.mxu0 %v987
      %v989 = vand.u32 %v237, 4294901760
      %v990 = vsub.f32 %v237, %v989
      %v991 = vand.u32 %v990, 4294901760
      %992 = vmatpush.msra.mxu0 %v991
      %v993 = vand.u32 %v235, 4294901760
      %v994 = vsub.f32 %v235, %v993
      %v995 = vand.u32 %v994, 4294901760
      %996 = vmatpush.msra.mxu0 %v995
      %v997 = vand.u32 %v233, 4294901760
      %v998 = vsub.f32 %v233, %v997
      %v999 = vand.u32 %v998, 4294901760
      %1000 = vmatpush.msra.mxu0 %v999
      %v1001 = vand.u32 %v231, 4294901760
      %v1002 = vsub.f32 %v231, %v1001
      %v1003 = vand.u32 %v1002, 4294901760
      %1004 = vmatpush.msra.mxu0 %v1003
      %v1005 = vand.u32 %v229, 4294901760
      %v1006 = vsub.f32 %v229, %v1005
      %v1007 = vand.u32 %v1006, 4294901760
      %1008 = vmatpush.msra.mxu0 %v1007
      %v1009 = vand.u32 %v227, 4294901760
      %v1010 = vsub.f32 %v227, %v1009
      %v1011 = vand.u32 %v1010, 4294901760
      %1012 = vmatpush.msra.mxu0 %v1011
      %v1013 = vand.u32 %v225, 4294901760
      %v1014 = vsub.f32 %v225, %v1013
      %v1015 = vand.u32 %v1014, 4294901760
      %1016 = vmatpush.msra.mxu0 %v1015
      %v1017 = vand.u32 %v223, 4294901760
      %v1018 = vsub.f32 %v223, %v1017
      %v1019 = vand.u32 %v1018, 4294901760
      %1020 = vmatpush.msra.mxu0 %v1019
      %v1021 = vand.u32 %v221, 4294901760
      %v1022 = vsub.f32 %v221, %v1021
      %v1023 = vand.u32 %v1022, 4294901760
      %1024 = vmatpush.msra.mxu0 %v1023
      %v1025 = vand.u32 %v219, 4294901760
      %v1026 = vsub.f32 %v219, %v1025
      %v1027 = vand.u32 %v1026, 4294901760
      %1028 = vmatpush.msra.mxu0 %v1027
      %v1029 = vand.u32 %v217, 4294901760
      %v1030 = vsub.f32 %v217, %v1029
      %v1031 = vand.u32 %v1030, 4294901760
      %1032 = vmatpush.msra.mxu0 %v1031
      %v1033 = vand.u32 %v215, 4294901760
      %v1034 = vsub.f32 %v215, %v1033
      %v1035 = vand.u32 %v1034, 4294901760
      %1036 = vmatpush.msra.mxu0 %v1035
      %v1037 = vand.u32 %v213, 4294901760
      %v1038 = vsub.f32 %v213, %v1037
      %v1039 = vand.u32 %v1038, 4294901760
      %1040 = vmatpush.msra.mxu0 %v1039
      %v1041 = vand.u32 %v211, 4294901760
      %v1042 = vsub.f32 %v211, %v1041
      %v1043 = vand.u32 %v1042, 4294901760
      %1044 = vmatpush.msra.mxu0 %v1043
      %v1045 = vand.u32 %v172, 4294901760
      %1046 = vmatmul.f32.gmra.mxu0 %v1045
      %v1047 = vpop.f32.mrf.mxu0
      %v1048 = vadd.f32 %v961, %v1047
      %v1049 = vand.u32 %v174, 4294901760
      %1050 = vmatmul.f32.gmra.mxu0 %v1049
      %v1051 = vpop.f32.mrf.mxu0
      %v1052 = vadd.f32 %v967, %v1051
      %v1053 = vand.u32 %v176, 4294901760
      %1054 = vmatmul.f32.gmra.mxu0 %v1053
      %v1055 = vpop.f32.mrf.mxu0
      %v1056 = vadd.f32 %v973, %v1055
      %v1057 = vand.u32 %v178, 4294901760
      %1058 = vmatmul.f32.gmra.mxu0 %v1057
      %v1059 = vpop.f32.mrf.mxu0
      %v1060 = vadd.f32 %v979, %v1059
      %1061 = vdwg.mxu0
      %v1062 = vand.u32 %v241, 4294901760
      %1063 = vmatpush.msra.mxu0 %v1062
      %v1064 = vand.u32 %v239, 4294901760
      %1065 = vmatpush.msra.mxu0 %v1064
      %v1066 = vand.u32 %v237, 4294901760
      %1067 = vmatpush.msra.mxu0 %v1066
      %v1068 = vand.u32 %v235, 4294901760
      %1069 = vmatpush.msra.mxu0 %v1068
      %v1070 = vand.u32 %v233, 4294901760
      %1071 = vmatpush.msra.mxu0 %v1070
      %v1072 = vand.u32 %v231, 4294901760
      %1073 = vmatpush.msra.mxu0 %v1072
      %v1074 = vand.u32 %v229, 4294901760
      %1075 = vmatpush.msra.mxu0 %v1074
      %v1076 = vand.u32 %v227, 4294901760
      %1077 = vmatpush.msra.mxu0 %v1076
      %v1078 = vand.u32 %v225, 4294901760
      %1079 = vmatpush.msra.mxu0 %v1078
      %v1080 = vand.u32 %v223, 4294901760
      %1081 = vmatpush.msra.mxu0 %v1080
      %v1082 = vand.u32 %v221, 4294901760
      %1083 = vmatpush.msra.mxu0 %v1082
      %v1084 = vand.u32 %v219, 4294901760
      %1085 = vmatpush.msra.mxu0 %v1084
      %v1086 = vand.u32 %v217, 4294901760
      %1087 = vmatpush.msra.mxu0 %v1086
      %v1088 = vand.u32 %v215, 4294901760
      %1089 = vmatpush.msra.mxu0 %v1088
      %v1090 = vand.u32 %v213, 4294901760
      %1091 = vmatpush.msra.mxu0 %v1090
      %v1092 = vand.u32 %v211, 4294901760
      %1093 = vmatpush.msra.mxu0 %v1092
      %v1094 = vand.u32 %v172, 4294901760
      %1095 = vmatmul.f32.gmra.mxu0 %v1094
      %v1096 = vpop.f32.mrf.mxu0
      %v1097 = vadd.f32 %v1048, %v1096
      %v1098 = vand.u32 %v174, 4294901760
      %1099 = vmatmul.f32.gmra.mxu0 %v1098
      %v1100 = vpop.f32.mrf.mxu0
      %v1101 = vadd.f32 %v1052, %v1100
      %v1102 = vand.u32 %v176, 4294901760
      %1103 = vmatmul.f32.gmra.mxu0 %v1102
      %v1104 = vpop.f32.mrf.mxu0
      %v1105 = vadd.f32 %v1056, %v1104
      %v1106 = vand.u32 %v178, 4294901760
      %1107 = vmatmul.f32.gmra.mxu0 %v1106
      %v1108 = vpop.f32.mrf.mxu0
      %v1109 = vadd.f32 %v1060, %v1108
      %1110 = vdwg.mxu0
      %v1111 = vand.u32 %v210, 4294901760
      %1112 = vmatpush.msra.mxu0 %v1111
      %v1113 = vand.u32 %v208, 4294901760
      %1114 = vmatpush.msra.mxu0 %v1113
      %v1115 = vand.u32 %v206, 4294901760
      %1116 = vmatpush.msra.mxu0 %v1115
      %v1117 = vand.u32 %v204, 4294901760
      %1118 = vmatpush.msra.mxu0 %v1117
      %v1119 = vand.u32 %v202, 4294901760
      %1120 = vmatpush.msra.mxu0 %v1119
      %v1121 = vand.u32 %v200, 4294901760
      %1122 = vmatpush.msra.mxu0 %v1121
      %v1123 = vand.u32 %v198, 4294901760
      %1124 = vmatpush.msra.mxu0 %v1123
      %v1125 = vand.u32 %v196, 4294901760
      %1126 = vmatpush.msra.mxu0 %v1125
      %v1127 = vand.u32 %v194, 4294901760
      %1128 = vmatpush.msra.mxu0 %v1127
      %v1129 = vand.u32 %v192, 4294901760
      %1130 = vmatpush.msra.mxu0 %v1129
      %v1131 = vand.u32 %v190, 4294901760
      %1132 = vmatpush.msra.mxu0 %v1131
      %v1133 = vand.u32 %v188, 4294901760
      %1134 = vmatpush.msra.mxu0 %v1133
      %v1135 = vand.u32 %v186, 4294901760
      %1136 = vmatpush.msra.mxu0 %v1135
      %v1137 = vand.u32 %v184, 4294901760
      %1138 = vmatpush.msra.mxu0 %v1137
      %v1139 = vand.u32 %v182, 4294901760
      %1140 = vmatpush.msra.mxu0 %v1139
      %v1141 = vand.u32 %v180, 4294901760
      %1142 = vmatpush.msra.mxu0 %v1141
      %v1143 = vand.u32 %v171, 4294901760
      %v1144 = vsub.f32 %v171, %v1143
      %v1145 = vand.u32 %v1144, 4294901760
      %v1146 = vsub.f32 %v1144, %v1145
      %v1147 = vand.u32 %v1146, 4294901760
      %1148 = vmatmul.f32.gmra.mxu0 %v1147
      %v1149 = vpop.f32.mrf.mxu0
      %v1150 = vadd.f32 0.0, %v1149
      %v1151 = vand.u32 %v173, 4294901760
      %v1152 = vsub.f32 %v173, %v1151
      %v1153 = vand.u32 %v1152, 4294901760
      %v1154 = vsub.f32 %v1152, %v1153
      %v1155 = vand.u32 %v1154, 4294901760
      %1156 = vmatmul.f32.gmra.mxu0 %v1155
      %v1157 = vpop.f32.mrf.mxu0
      %v1158 = vadd.f32 0.0, %v1157
      %v1159 = vand.u32 %v175, 4294901760
      %v1160 = vsub.f32 %v175, %v1159
      %v1161 = vand.u32 %v1160, 4294901760
      %v1162 = vsub.f32 %v1160, %v1161
      %v1163 = vand.u32 %v1162, 4294901760
      %1164 = vmatmul.f32.gmra.mxu0 %v1163
      %v1165 = vpop.f32.mrf.mxu0
      %v1166 = vadd.f32 0.0, %v1165
      %v1167 = vand.u32 %v177, 4294901760
      %v1168 = vsub.f32 %v177, %v1167
      %v1169 = vand.u32 %v1168, 4294901760
      %v1170 = vsub.f32 %v1168, %v1169
      %v1171 = vand.u32 %v1170, 4294901760
      %1172 = vmatmul.f32.gmra.mxu0 %v1171
      %v1173 = vpop.f32.mrf.mxu0
      %v1174 = vadd.f32 0.0, %v1173
      %1175 = vdwg.mxu0
      %v1176 = vand.u32 %v210, 4294901760
      %v1177 = vsub.f32 %v210, %v1176
      %v1178 = vand.u32 %v1177, 4294901760
      %v1179 = vsub.f32 %v1177, %v1178
      %v1180 = vand.u32 %v1179, 4294901760
      %1181 = vmatpush.msra.mxu0 %v1180
      %v1182 = vand.u32 %v208, 4294901760
      %v1183 = vsub.f32 %v208, %v1182
      %v1184 = vand.u32 %v1183, 4294901760
      %v1185 = vsub.f32 %v1183, %v1184
      %v1186 = vand.u32 %v1185, 4294901760
      %1187 = vmatpush.msra.mxu0 %v1186
      %v1188 = vand.u32 %v206, 4294901760
      %v1189 = vsub.f32 %v206, %v1188
      %v1190 = vand.u32 %v1189, 4294901760
      %v1191 = vsub.f32 %v1189, %v1190
      %v1192 = vand.u32 %v1191, 4294901760
      %1193 = vmatpush.msra.mxu0 %v1192
      %v1194 = vand.u32 %v204, 4294901760
      %v1195 = vsub.f32 %v204, %v1194
      %v1196 = vand.u32 %v1195, 4294901760
      %v1197 = vsub.f32 %v1195, %v1196
      %v1198 = vand.u32 %v1197, 4294901760
      %1199 = vmatpush.msra.mxu0 %v1198
      %v1200 = vand.u32 %v202, 4294901760
      %v1201 = vsub.f32 %v202, %v1200
      %v1202 = vand.u32 %v1201, 4294901760
      %v1203 = vsub.f32 %v1201, %v1202
      %v1204 = vand.u32 %v1203, 4294901760
      %1205 = vmatpush.msra.mxu0 %v1204
      %v1206 = vand.u32 %v200, 4294901760
      %v1207 = vsub.f32 %v200, %v1206
      %v1208 = vand.u32 %v1207, 4294901760
      %v1209 = vsub.f32 %v1207, %v1208
      %v1210 = vand.u32 %v1209, 4294901760
      %1211 = vmatpush.msra.mxu0 %v1210
      %v1212 = vand.u32 %v198, 4294901760
      %v1213 = vsub.f32 %v198, %v1212
      %v1214 = vand.u32 %v1213, 4294901760
      %v1215 = vsub.f32 %v1213, %v1214
      %v1216 = vand.u32 %v1215, 4294901760
      %1217 = vmatpush.msra.mxu0 %v1216
      %v1218 = vand.u32 %v196, 4294901760
      %v1219 = vsub.f32 %v196, %v1218
      %v1220 = vand.u32 %v1219, 4294901760
      %v1221 = vsub.f32 %v1219, %v1220
      %v1222 = vand.u32 %v1221, 4294901760
      %1223 = vmatpush.msra.mxu0 %v1222
      %v1224 = vand.u32 %v194, 4294901760
      %v1225 = vsub.f32 %v194, %v1224
      %v1226 = vand.u32 %v1225, 4294901760
      %v1227 = vsub.f32 %v1225, %v1226
      %v1228 = vand.u32 %v1227, 4294901760
      %1229 = vmatpush.msra.mxu0 %v1228
      %v1230 = vand.u32 %v192, 4294901760
      %v1231 = vsub.f32 %v192, %v1230
      %v1232 = vand.u32 %v1231, 4294901760
      %v1233 = vsub.f32 %v1231, %v1232
      %v1234 = vand.u32 %v1233, 4294901760
      %1235 = vmatpush.msra.mxu0 %v1234
      %v1236 = vand.u32 %v190, 4294901760
      %v1237 = vsub.f32 %v190, %v1236
      %v1238 = vand.u32 %v1237, 4294901760
      %v1239 = vsub.f32 %v1237, %v1238
      %v1240 = vand.u32 %v1239, 4294901760
      %1241 = vmatpush.msra.mxu0 %v1240
      %v1242 = vand.u32 %v188, 4294901760
      %v1243 = vsub.f32 %v188, %v1242
      %v1244 = vand.u32 %v1243, 4294901760
      %v1245 = vsub.f32 %v1243, %v1244
      %v1246 = vand.u32 %v1245, 4294901760
      %1247 = vmatpush.msra.mxu0 %v1246
      %v1248 = vand.u32 %v186, 4294901760
      %v1249 = vsub.f32 %v186, %v1248
      %v1250 = vand.u32 %v1249, 4294901760
      %v1251 = vsub.f32 %v1249, %v1250
      %v1252 = vand.u32 %v1251, 4294901760
      %1253 = vmatpush.msra.mxu0 %v1252
      %v1254 = vand.u32 %v184, 4294901760
      %v1255 = vsub.f32 %v184, %v1254
      %v1256 = vand.u32 %v1255, 4294901760
      %v1257 = vsub.f32 %v1255, %v1256
      %v1258 = vand.u32 %v1257, 4294901760
      %1259 = vmatpush.msra.mxu0 %v1258
      %v1260 = vand.u32 %v182, 4294901760
      %v1261 = vsub.f32 %v182, %v1260
      %v1262 = vand.u32 %v1261, 4294901760
      %v1263 = vsub.f32 %v1261, %v1262
      %v1264 = vand.u32 %v1263, 4294901760
      %1265 = vmatpush.msra.mxu0 %v1264
      %v1266 = vand.u32 %v180, 4294901760
      %v1267 = vsub.f32 %v180, %v1266
      %v1268 = vand.u32 %v1267, 4294901760
      %v1269 = vsub.f32 %v1267, %v1268
      %v1270 = vand.u32 %v1269, 4294901760
      %1271 = vmatpush.msra.mxu0 %v1270
      %v1272 = vand.u32 %v171, 4294901760
      %1273 = vmatmul.f32.gmra.mxu0 %v1272
      %v1274 = vpop.f32.mrf.mxu0
      %v1275 = vadd.f32 %v1150, %v1274
      %v1276 = vand.u32 %v173, 4294901760
      %1277 = vmatmul.f32.gmra.mxu0 %v1276
      %v1278 = vpop.f32.mrf.mxu0
      %v1279 = vadd.f32 %v1158, %v1278
      %v1280 = vand.u32 %v175, 4294901760
      %1281 = vmatmul.f32.gmra.mxu0 %v1280
      %v1282 = vpop.f32.mrf.mxu0
      %v1283 = vadd.f32 %v1166, %v1282
      %v1284 = vand.u32 %v177, 4294901760
      %1285 = vmatmul.f32.gmra.mxu0 %v1284
      %v1286 = vpop.f32.mrf.mxu0
      %v1287 = vadd.f32 %v1174, %v1286
      %1288 = vdwg.mxu0
      %v1289 = vand.u32 %v210, 4294901760
      %v1290 = vsub.f32 %v210, %v1289
      %1291 = vmatpush.msra.mxu0 %v1290
      %v1292 = vand.u32 %v208, 4294901760
      %v1293 = vsub.f32 %v208, %v1292
      %1294 = vmatpush.msra.mxu0 %v1293
      %v1295 = vand.u32 %v206, 4294901760
      %v1296 = vsub.f32 %v206, %v1295
      %1297 = vmatpush.msra.mxu0 %v1296
      %v1298 = vand.u32 %v204, 4294901760
      %v1299 = vsub.f32 %v204, %v1298
      %1300 = vmatpush.msra.mxu0 %v1299
      %v1301 = vand.u32 %v202, 4294901760
      %v1302 = vsub.f32 %v202, %v1301
      %1303 = vmatpush.msra.mxu0 %v1302
      %v1304 = vand.u32 %v200, 4294901760
      %v1305 = vsub.f32 %v200, %v1304
      %1306 = vmatpush.msra.mxu0 %v1305
      %v1307 = vand.u32 %v198, 4294901760
      %v1308 = vsub.f32 %v198, %v1307
      %1309 = vmatpush.msra.mxu0 %v1308
      %v1310 = vand.u32 %v196, 4294901760
      %v1311 = vsub.f32 %v196, %v1310
      %1312 = vmatpush.msra.mxu0 %v1311
      %v1313 = vand.u32 %v194, 4294901760
      %v1314 = vsub.f32 %v194, %v1313
      %1315 = vmatpush.msra.mxu0 %v1314
      %v1316 = vand.u32 %v192, 4294901760
      %v1317 = vsub.f32 %v192, %v1316
      %1318 = vmatpush.msra.mxu0 %v1317
      %v1319 = vand.u32 %v190, 4294901760
      %v1320 = vsub.f32 %v190, %v1319
      %1321 = vmatpush.msra.mxu0 %v1320
      %v1322 = vand.u32 %v188, 4294901760
      %v1323 = vsub.f32 %v188, %v1322
      %1324 = vmatpush.msra.mxu0 %v1323
      %v1325 = vand.u32 %v186, 4294901760
      %v1326 = vsub.f32 %v186, %v1325
      %1327 = vmatpush.msra.mxu0 %v1326
      %v1328 = vand.u32 %v184, 4294901760
      %v1329 = vsub.f32 %v184, %v1328
      %1330 = vmatpush.msra.mxu0 %v1329
      %v1331 = vand.u32 %v182, 4294901760
      %v1332 = vsub.f32 %v182, %v1331
      %1333 = vmatpush.msra.mxu0 %v1332
      %v1334 = vand.u32 %v180, 4294901760
      %v1335 = vsub.f32 %v180, %v1334
      %1336 = vmatpush.msra.mxu0 %v1335
      %v1337 = vand.u32 %v171, 4294901760
      %v1338 = vsub.f32 %v171, %v1337
      %1339 = vmatmul.f32.gmra.mxu0 %v1338
      %v1340 = vpop.f32.mrf.mxu0
      %v1341 = vadd.f32 %v1275, %v1340
      %v1342 = vand.u32 %v173, 4294901760
      %v1343 = vsub.f32 %v173, %v1342
      %1344 = vmatmul.f32.gmra.mxu0 %v1343
      %v1345 = vpop.f32.mrf.mxu0
      %v1346 = vadd.f32 %v1279, %v1345
      %v1347 = vand.u32 %v175, 4294901760
      %v1348 = vsub.f32 %v175, %v1347
      %1349 = vmatmul.f32.gmra.mxu0 %v1348
      %v1350 = vpop.f32.mrf.mxu0
      %v1351 = vadd.f32 %v1283, %v1350
      %v1352 = vand.u32 %v177, 4294901760
      %v1353 = vsub.f32 %v177, %v1352
      %1354 = vmatmul.f32.gmra.mxu0 %v1353
      %v1355 = vpop.f32.mrf.mxu0
      %v1356 = vadd.f32 %v1287, %v1355
      %1357 = vdwg.mxu0
      %v1358 = vand.u32 %v210, 4294901760
      %1359 = vmatpush.msra.mxu0 %v1358
      %v1360 = vand.u32 %v208, 4294901760
      %1361 = vmatpush.msra.mxu0 %v1360
      %v1362 = vand.u32 %v206, 4294901760
      %1363 = vmatpush.msra.mxu0 %v1362
      %v1364 = vand.u32 %v204, 4294901760
      %1365 = vmatpush.msra.mxu0 %v1364
      %v1366 = vand.u32 %v202, 4294901760
      %1367 = vmatpush.msra.mxu0 %v1366
      %v1368 = vand.u32 %v200, 4294901760
      %1369 = vmatpush.msra.mxu0 %v1368
      %v1370 = vand.u32 %v198, 4294901760
      %1371 = vmatpush.msra.mxu0 %v1370
      %v1372 = vand.u32 %v196, 4294901760
      %1373 = vmatpush.msra.mxu0 %v1372
      %v1374 = vand.u32 %v194, 4294901760
      %1375 = vmatpush.msra.mxu0 %v1374
      %v1376 = vand.u32 %v192, 4294901760
      %1377 = vmatpush.msra.mxu0 %v1376
      %v1378 = vand.u32 %v190, 4294901760
      %1379 = vmatpush.msra.mxu0 %v1378
      %v1380 = vand.u32 %v188, 4294901760
      %1381 = vmatpush.msra.mxu0 %v1380
      %v1382 = vand.u32 %v186, 4294901760
      %1383 = vmatpush.msra.mxu0 %v1382
      %v1384 = vand.u32 %v184, 4294901760
      %1385 = vmatpush.msra.mxu0 %v1384
      %v1386 = vand.u32 %v182, 4294901760
      %1387 = vmatpush.msra.mxu0 %v1386
      %v1388 = vand.u32 %v180, 4294901760
      %1389 = vmatpush.msra.mxu0 %v1388
      %v1390 = vand.u32 %v171, 4294901760
      %v1391 = vsub.f32 %v171, %v1390
      %v1392 = vand.u32 %v1391, 4294901760
      %1393 = vmatmul.f32.gmra.mxu0 %v1392
      %v1394 = vpop.f32.mrf.mxu0
      %v1395 = vadd.f32 %v1341, %v1394
      %v1396 = vand.u32 %v173, 4294901760
      %v1397 = vsub.f32 %v173, %v1396
      %v1398 = vand.u32 %v1397, 4294901760
      %1399 = vmatmul.f32.gmra.mxu0 %v1398
      %v1400 = vpop.f32.mrf.mxu0
      %v1401 = vadd.f32 %v1346, %v1400
      %v1402 = vand.u32 %v175, 4294901760
      %v1403 = vsub.f32 %v175, %v1402
      %v1404 = vand.u32 %v1403, 4294901760
      %1405 = vmatmul.f32.gmra.mxu0 %v1404
      %v1406 = vpop.f32.mrf.mxu0
      %v1407 = vadd.f32 %v1351, %v1406
      %v1408 = vand.u32 %v177, 4294901760
      %v1409 = vsub.f32 %v177, %v1408
      %v1410 = vand.u32 %v1409, 4294901760
      %1411 = vmatmul.f32.gmra.mxu0 %v1410
      %v1412 = vpop.f32.mrf.mxu0
      %v1413 = vadd.f32 %v1356, %v1412
      %1414 = vdwg.mxu0
      %v1415 = vand.u32 %v210, 4294901760
      %v1416 = vsub.f32 %v210, %v1415
      %v1417 = vand.u32 %v1416, 4294901760
      %1418 = vmatpush.msra.mxu0 %v1417
      %v1419 = vand.u32 %v208, 4294901760
      %v1420 = vsub.f32 %v208, %v1419
      %v1421 = vand.u32 %v1420, 4294901760
      %1422 = vmatpush.msra.mxu0 %v1421
      %v1423 = vand.u32 %v206, 4294901760
      %v1424 = vsub.f32 %v206, %v1423
      %v1425 = vand.u32 %v1424, 4294901760
      %1426 = vmatpush.msra.mxu0 %v1425
      %v1427 = vand.u32 %v204, 4294901760
      %v1428 = vsub.f32 %v204, %v1427
      %v1429 = vand.u32 %v1428, 4294901760
      %1430 = vmatpush.msra.mxu0 %v1429
      %v1431 = vand.u32 %v202, 4294901760
      %v1432 = vsub.f32 %v202, %v1431
      %v1433 = vand.u32 %v1432, 4294901760
      %1434 = vmatpush.msra.mxu0 %v1433
      %v1435 = vand.u32 %v200, 4294901760
      %v1436 = vsub.f32 %v200, %v1435
      %v1437 = vand.u32 %v1436, 4294901760
      %1438 = vmatpush.msra.mxu0 %v1437
      %v1439 = vand.u32 %v198, 4294901760
      %v1440 = vsub.f32 %v198, %v1439
      %v1441 = vand.u32 %v1440, 4294901760
      %1442 = vmatpush.msra.mxu0 %v1441
      %v1443 = vand.u32 %v196, 4294901760
      %v1444 = vsub.f32 %v196, %v1443
      %v1445 = vand.u32 %v1444, 4294901760
      %1446 = vmatpush.msra.mxu0 %v1445
      %v1447 = vand.u32 %v194, 4294901760
      %v1448 = vsub.f32 %v194, %v1447
      %v1449 = vand.u32 %v1448, 4294901760
      %1450 = vmatpush.msra.mxu0 %v1449
      %v1451 = vand.u32 %v192, 4294901760
      %v1452 = vsub.f32 %v192, %v1451
      %v1453 = vand.u32 %v1452, 4294901760
      %1454 = vmatpush.msra.mxu0 %v1453
      %v1455 = vand.u32 %v190, 4294901760
      %v1456 = vsub.f32 %v190, %v1455
      %v1457 = vand.u32 %v1456, 4294901760
      %1458 = vmatpush.msra.mxu0 %v1457
      %v1459 = vand.u32 %v188, 4294901760
      %v1460 = vsub.f32 %v188, %v1459
      %v1461 = vand.u32 %v1460, 4294901760
      %1462 = vmatpush.msra.mxu0 %v1461
      %v1463 = vand.u32 %v186, 4294901760
      %v1464 = vsub.f32 %v186, %v1463
      %v1465 = vand.u32 %v1464, 4294901760
      %1466 = vmatpush.msra.mxu0 %v1465
      %v1467 = vand.u32 %v184, 4294901760
      %v1468 = vsub.f32 %v184, %v1467
      %v1469 = vand.u32 %v1468, 4294901760
      %1470 = vmatpush.msra.mxu0 %v1469
      %v1471 = vand.u32 %v182, 4294901760
      %v1472 = vsub.f32 %v182, %v1471
      %v1473 = vand.u32 %v1472, 4294901760
      %1474 = vmatpush.msra.mxu0 %v1473
      %v1475 = vand.u32 %v180, 4294901760
      %v1476 = vsub.f32 %v180, %v1475
      %v1477 = vand.u32 %v1476, 4294901760
      %1478 = vmatpush.msra.mxu0 %v1477
      %v1479 = vand.u32 %v171, 4294901760
      %1480 = vmatmul.f32.gmra.mxu0 %v1479
      %v1481 = vpop.f32.mrf.mxu0
      %v1482 = vadd.f32 %v1395, %v1481
      %v1483 = vand.u32 %v173, 4294901760
      %1484 = vmatmul.f32.gmra.mxu0 %v1483
      %v1485 = vpop.f32.mrf.mxu0
      %v1486 = vadd.f32 %v1401, %v1485
      %v1487 = vand.u32 %v175, 4294901760
      %1488 = vmatmul.f32.gmra.mxu0 %v1487
      %v1489 = vpop.f32.mrf.mxu0
      %v1490 = vadd.f32 %v1407, %v1489
      %v1491 = vand.u32 %v177, 4294901760
      %1492 = vmatmul.f32.gmra.mxu0 %v1491
      %v1493 = vpop.f32.mrf.mxu0
      %v1494 = vadd.f32 %v1413, %v1493
      %1495 = vdwg.mxu0
      %v1496 = vand.u32 %v210, 4294901760
      %1497 = vmatpush.msra.mxu0 %v1496
      %v1498 = vand.u32 %v208, 4294901760
      %1499 = vmatpush.msra.mxu0 %v1498
      %v1500 = vand.u32 %v206, 4294901760
      %1501 = vmatpush.msra.mxu0 %v1500
      %v1502 = vand.u32 %v204, 4294901760
      %1503 = vmatpush.msra.mxu0 %v1502
      %v1504 = vand.u32 %v202, 4294901760
      %1505 = vmatpush.msra.mxu0 %v1504
      %v1506 = vand.u32 %v200, 4294901760
      %1507 = vmatpush.msra.mxu0 %v1506
      %v1508 = vand.u32 %v198, 4294901760
      %1509 = vmatpush.msra.mxu0 %v1508
      %v1510 = vand.u32 %v196, 4294901760
      %1511 = vmatpush.msra.mxu0 %v1510
      %v1512 = vand.u32 %v194, 4294901760
      %1513 = vmatpush.msra.mxu0 %v1512
      %v1514 = vand.u32 %v192, 4294901760
      %1515 = vmatpush.msra.mxu0 %v1514
      %v1516 = vand.u32 %v190, 4294901760
      %1517 = vmatpush.msra.mxu0 %v1516
      %v1518 = vand.u32 %v188, 4294901760
      %1519 = vmatpush.msra.mxu0 %v1518
      %v1520 = vand.u32 %v186, 4294901760
      %1521 = vmatpush.msra.mxu0 %v1520
      %v1522 = vand.u32 %v184, 4294901760
      %1523 = vmatpush.msra.mxu0 %v1522
      %v1524 = vand.u32 %v182, 4294901760
      %1525 = vmatpush.msra.mxu0 %v1524
      %v1526 = vand.u32 %v180, 4294901760
      %1527 = vmatpush.msra.mxu0 %v1526
      %v1528 = vand.u32 %v171, 4294901760
      %1529 = vmatmul.f32.gmra.mxu0 %v1528
      %v1530 = vpop.f32.mrf.mxu0
      %v1531 = vadd.f32 %v1482, %v1530
      %v1532 = vand.u32 %v173, 4294901760
      %1533 = vmatmul.f32.gmra.mxu0 %v1532
      %v1534 = vpop.f32.mrf.mxu0
      %v1535 = vadd.f32 %v1486, %v1534
      %v1536 = vand.u32 %v175, 4294901760
      %1537 = vmatmul.f32.gmra.mxu0 %v1536
      %v1538 = vpop.f32.mrf.mxu0
      %v1539 = vadd.f32 %v1490, %v1538
      %v1540 = vand.u32 %v177, 4294901760
      %1541 = vmatmul.f32.gmra.mxu0 %v1540
      %v1542 = vpop.f32.mrf.mxu0
      %v1543 = vadd.f32 %v1494, %v1542
      %1544 = vdwg.mxu0
      %v1545 = vand.u32 %v242, 4294901760
      %1546 = vmatpush.msra.mxu0 %v1545
      %v1547 = vand.u32 %v240, 4294901760
      %1548 = vmatpush.msra.mxu0 %v1547
      %v1549 = vand.u32 %v238, 4294901760
      %1550 = vmatpush.msra.mxu0 %v1549
      %v1551 = vand.u32 %v236, 4294901760
      %1552 = vmatpush.msra.mxu0 %v1551
      %v1553 = vand.u32 %v234, 4294901760
      %1554 = vmatpush.msra.mxu0 %v1553
      %v1555 = vand.u32 %v232, 4294901760
      %1556 = vmatpush.msra.mxu0 %v1555
      %v1557 = vand.u32 %v230, 4294901760
      %1558 = vmatpush.msra.mxu0 %v1557
      %v1559 = vand.u32 %v228, 4294901760
      %1560 = vmatpush.msra.mxu0 %v1559
      %v1561 = vand.u32 %v226, 4294901760
      %1562 = vmatpush.msra.mxu0 %v1561
      %v1563 = vand.u32 %v224, 4294901760
      %1564 = vmatpush.msra.mxu0 %v1563
      %v1565 = vand.u32 %v222, 4294901760
      %1566 = vmatpush.msra.mxu0 %v1565
      %v1567 = vand.u32 %v220, 4294901760
      %1568 = vmatpush.msra.mxu0 %v1567
      %v1569 = vand.u32 %v218, 4294901760
      %1570 = vmatpush.msra.mxu0 %v1569
      %v1571 = vand.u32 %v216, 4294901760
      %1572 = vmatpush.msra.mxu0 %v1571
      %v1573 = vand.u32 %v214, 4294901760
      %1574 = vmatpush.msra.mxu0 %v1573
      %v1575 = vand.u32 %v212, 4294901760
      %1576 = vmatpush.msra.mxu0 %v1575
      %v1577 = vand.u32 %v172, 4294901760
      %v1578 = vsub.f32 %v172, %v1577
      %v1579 = vand.u32 %v1578, 4294901760
      %v1580 = vsub.f32 %v1578, %v1579
      %v1581 = vand.u32 %v1580, 4294901760
      %1582 = vmatmul.f32.gmra.mxu0 %v1581
      %v1583 = vpop.f32.mrf.mxu0
      %v1584 = vadd.f32 %v1531, %v1583
      %v1585 = vand.u32 %v174, 4294901760
      %v1586 = vsub.f32 %v174, %v1585
      %v1587 = vand.u32 %v1586, 4294901760
      %v1588 = vsub.f32 %v1586, %v1587
      %v1589 = vand.u32 %v1588, 4294901760
      %1590 = vmatmul.f32.gmra.mxu0 %v1589
      %v1591 = vpop.f32.mrf.mxu0
      %v1592 = vadd.f32 %v1535, %v1591
      %v1593 = vand.u32 %v176, 4294901760
      %v1594 = vsub.f32 %v176, %v1593
      %v1595 = vand.u32 %v1594, 4294901760
      %v1596 = vsub.f32 %v1594, %v1595
      %v1597 = vand.u32 %v1596, 4294901760
      %1598 = vmatmul.f32.gmra.mxu0 %v1597
      %v1599 = vpop.f32.mrf.mxu0
      %v1600 = vadd.f32 %v1539, %v1599
      %v1601 = vand.u32 %v178, 4294901760
      %v1602 = vsub.f32 %v178, %v1601
      %v1603 = vand.u32 %v1602, 4294901760
      %v1604 = vsub.f32 %v1602, %v1603
      %v1605 = vand.u32 %v1604, 4294901760
      %1606 = vmatmul.f32.gmra.mxu0 %v1605
      %v1607 = vpop.f32.mrf.mxu0
      %v1608 = vadd.f32 %v1543, %v1607
      %1609 = vdwg.mxu0
      %v1610 = vand.u32 %v242, 4294901760
      %v1611 = vsub.f32 %v242, %v1610
      %v1612 = vand.u32 %v1611, 4294901760
      %v1613 = vsub.f32 %v1611, %v1612
      %v1614 = vand.u32 %v1613, 4294901760
      %1615 = vmatpush.msra.mxu0 %v1614
      %v1616 = vand.u32 %v240, 4294901760
      %v1617 = vsub.f32 %v240, %v1616
      %v1618 = vand.u32 %v1617, 4294901760
      %v1619 = vsub.f32 %v1617, %v1618
      %v1620 = vand.u32 %v1619, 4294901760
      %1621 = vmatpush.msra.mxu0 %v1620
      %v1622 = vand.u32 %v238, 4294901760
      %v1623 = vsub.f32 %v238, %v1622
      %v1624 = vand.u32 %v1623, 4294901760
      %v1625 = vsub.f32 %v1623, %v1624
      %v1626 = vand.u32 %v1625, 4294901760
      %1627 = vmatpush.msra.mxu0 %v1626
      %v1628 = vand.u32 %v236, 4294901760
      %v1629 = vsub.f32 %v236, %v1628
      %v1630 = vand.u32 %v1629, 4294901760
      %v1631 = vsub.f32 %v1629, %v1630
      %v1632 = vand.u32 %v1631, 4294901760
      %1633 = vmatpush.msra.mxu0 %v1632
      %v1634 = vand.u32 %v234, 4294901760
      %v1635 = vsub.f32 %v234, %v1634
      %v1636 = vand.u32 %v1635, 4294901760
      %v1637 = vsub.f32 %v1635, %v1636
      %v1638 = vand.u32 %v1637, 4294901760
      %1639 = vmatpush.msra.mxu0 %v1638
      %v1640 = vand.u32 %v232, 4294901760
      %v1641 = vsub.f32 %v232, %v1640
      %v1642 = vand.u32 %v1641, 4294901760
      %v1643 = vsub.f32 %v1641, %v1642
      %v1644 = vand.u32 %v1643, 4294901760
      %1645 = vmatpush.msra.mxu0 %v1644
      %v1646 = vand.u32 %v230, 4294901760
      %v1647 = vsub.f32 %v230, %v1646
      %v1648 = vand.u32 %v1647, 4294901760
      %v1649 = vsub.f32 %v1647, %v1648
      %v1650 = vand.u32 %v1649, 4294901760
      %1651 = vmatpush.msra.mxu0 %v1650
      %v1652 = vand.u32 %v228, 4294901760
      %v1653 = vsub.f32 %v228, %v1652
      %v1654 = vand.u32 %v1653, 4294901760
      %v1655 = vsub.f32 %v1653, %v1654
      %v1656 = vand.u32 %v1655, 4294901760
      %1657 = vmatpush.msra.mxu0 %v1656
      %v1658 = vand.u32 %v226, 4294901760
      %v1659 = vsub.f32 %v226, %v1658
      %v1660 = vand.u32 %v1659, 4294901760
      %v1661 = vsub.f32 %v1659, %v1660
      %v1662 = vand.u32 %v1661, 4294901760
      %1663 = vmatpush.msra.mxu0 %v1662
      %v1664 = vand.u32 %v224, 4294901760
      %v1665 = vsub.f32 %v224, %v1664
      %v1666 = vand.u32 %v1665, 4294901760
      %v1667 = vsub.f32 %v1665, %v1666
      %v1668 = vand.u32 %v1667, 4294901760
      %1669 = vmatpush.msra.mxu0 %v1668
      %v1670 = vand.u32 %v222, 4294901760
      %v1671 = vsub.f32 %v222, %v1670
      %v1672 = vand.u32 %v1671, 4294901760
      %v1673 = vsub.f32 %v1671, %v1672
      %v1674 = vand.u32 %v1673, 4294901760
      %1675 = vmatpush.msra.mxu0 %v1674
      %v1676 = vand.u32 %v220, 4294901760
      %v1677 = vsub.f32 %v220, %v1676
      %v1678 = vand.u32 %v1677, 4294901760
      %v1679 = vsub.f32 %v1677, %v1678
      %v1680 = vand.u32 %v1679, 4294901760
      %1681 = vmatpush.msra.mxu0 %v1680
      %v1682 = vand.u32 %v218, 4294901760
      %v1683 = vsub.f32 %v218, %v1682
      %v1684 = vand.u32 %v1683, 4294901760
      %v1685 = vsub.f32 %v1683, %v1684
      %v1686 = vand.u32 %v1685, 4294901760
      %1687 = vmatpush.msra.mxu0 %v1686
      %v1688 = vand.u32 %v216, 4294901760
      %v1689 = vsub.f32 %v216, %v1688
      %v1690 = vand.u32 %v1689, 4294901760
      %v1691 = vsub.f32 %v1689, %v1690
      %v1692 = vand.u32 %v1691, 4294901760
      %1693 = vmatpush.msra.mxu0 %v1692
      %v1694 = vand.u32 %v214, 4294901760
      %v1695 = vsub.f32 %v214, %v1694
      %v1696 = vand.u32 %v1695, 4294901760
      %v1697 = vsub.f32 %v1695, %v1696
      %v1698 = vand.u32 %v1697, 4294901760
      %1699 = vmatpush.msra.mxu0 %v1698
      %v1700 = vand.u32 %v212, 4294901760
      %v1701 = vsub.f32 %v212, %v1700
      %v1702 = vand.u32 %v1701, 4294901760
      %v1703 = vsub.f32 %v1701, %v1702
      %v1704 = vand.u32 %v1703, 4294901760
      %1705 = vmatpush.msra.mxu0 %v1704
      %v1706 = vand.u32 %v172, 4294901760
      %1707 = vmatmul.f32.gmra.mxu0 %v1706
      %v1708 = vpop.f32.mrf.mxu0
      %v1709 = vadd.f32 %v1584, %v1708
      %v1710 = vand.u32 %v174, 4294901760
      %1711 = vmatmul.f32.gmra.mxu0 %v1710
      %v1712 = vpop.f32.mrf.mxu0
      %v1713 = vadd.f32 %v1592, %v1712
      %v1714 = vand.u32 %v176, 4294901760
      %1715 = vmatmul.f32.gmra.mxu0 %v1714
      %v1716 = vpop.f32.mrf.mxu0
      %v1717 = vadd.f32 %v1600, %v1716
      %v1718 = vand.u32 %v178, 4294901760
      %1719 = vmatmul.f32.gmra.mxu0 %v1718
      %v1720 = vpop.f32.mrf.mxu0
      %v1721 = vadd.f32 %v1608, %v1720
      %1722 = vdwg.mxu0
      %v1723 = vand.u32 %v242, 4294901760
      %v1724 = vsub.f32 %v242, %v1723
      %1725 = vmatpush.msra.mxu0 %v1724
      %v1726 = vand.u32 %v240, 4294901760
      %v1727 = vsub.f32 %v240, %v1726
      %1728 = vmatpush.msra.mxu0 %v1727
      %v1729 = vand.u32 %v238, 4294901760
      %v1730 = vsub.f32 %v238, %v1729
      %1731 = vmatpush.msra.mxu0 %v1730
      %v1732 = vand.u32 %v236, 4294901760
      %v1733 = vsub.f32 %v236, %v1732
      %1734 = vmatpush.msra.mxu0 %v1733
      %v1735 = vand.u32 %v234, 4294901760
      %v1736 = vsub.f32 %v234, %v1735
      %1737 = vmatpush.msra.mxu0 %v1736
      %v1738 = vand.u32 %v232, 4294901760
      %v1739 = vsub.f32 %v232, %v1738
      %1740 = vmatpush.msra.mxu0 %v1739
      %v1741 = vand.u32 %v230, 4294901760
      %v1742 = vsub.f32 %v230, %v1741
      %1743 = vmatpush.msra.mxu0 %v1742
      %v1744 = vand.u32 %v228, 4294901760
      %v1745 = vsub.f32 %v228, %v1744
      %1746 = vmatpush.msra.mxu0 %v1745
      %v1747 = vand.u32 %v226, 4294901760
      %v1748 = vsub.f32 %v226, %v1747
      %1749 = vmatpush.msra.mxu0 %v1748
      %v1750 = vand.u32 %v224, 4294901760
      %v1751 = vsub.f32 %v224, %v1750
      %1752 = vmatpush.msra.mxu0 %v1751
      %v1753 = vand.u32 %v222, 4294901760
      %v1754 = vsub.f32 %v222, %v1753
      %1755 = vmatpush.msra.mxu0 %v1754
      %v1756 = vand.u32 %v220, 4294901760
      %v1757 = vsub.f32 %v220, %v1756
      %1758 = vmatpush.msra.mxu0 %v1757
      %v1759 = vand.u32 %v218, 4294901760
      %v1760 = vsub.f32 %v218, %v1759
      %1761 = vmatpush.msra.mxu0 %v1760
      %v1762 = vand.u32 %v216, 4294901760
      %v1763 = vsub.f32 %v216, %v1762
      %1764 = vmatpush.msra.mxu0 %v1763
      %v1765 = vand.u32 %v214, 4294901760
      %v1766 = vsub.f32 %v214, %v1765
      %1767 = vmatpush.msra.mxu0 %v1766
      %v1768 = vand.u32 %v212, 4294901760
      %v1769 = vsub.f32 %v212, %v1768
      %1770 = vmatpush.msra.mxu0 %v1769
      %v1771 = vand.u32 %v172, 4294901760
      %v1772 = vsub.f32 %v172, %v1771
      %1773 = vmatmul.f32.gmra.mxu0 %v1772
      %v1774 = vpop.f32.mrf.mxu0
      %v1775 = vadd.f32 %v1709, %v1774
      %v1776 = vand.u32 %v174, 4294901760
      %v1777 = vsub.f32 %v174, %v1776
      %1778 = vmatmul.f32.gmra.mxu0 %v1777
      %v1779 = vpop.f32.mrf.mxu0
      %v1780 = vadd.f32 %v1713, %v1779
      %v1781 = vand.u32 %v176, 4294901760
      %v1782 = vsub.f32 %v176, %v1781
      %1783 = vmatmul.f32.gmra.mxu0 %v1782
      %v1784 = vpop.f32.mrf.mxu0
      %v1785 = vadd.f32 %v1717, %v1784
      %v1786 = vand.u32 %v178, 4294901760
      %v1787 = vsub.f32 %v178, %v1786
      %1788 = vmatmul.f32.gmra.mxu0 %v1787
      %v1789 = vpop.f32.mrf.mxu0
      %v1790 = vadd.f32 %v1721, %v1789
      %1791 = vdwg.mxu0
      %v1792 = vand.u32 %v242, 4294901760
      %1793 = vmatpush.msra.mxu0 %v1792
      %v1794 = vand.u32 %v240, 4294901760
      %1795 = vmatpush.msra.mxu0 %v1794
      %v1796 = vand.u32 %v238, 4294901760
      %1797 = vmatpush.msra.mxu0 %v1796
      %v1798 = vand.u32 %v236, 4294901760
      %1799 = vmatpush.msra.mxu0 %v1798
      %v1800 = vand.u32 %v234, 4294901760
      %1801 = vmatpush.msra.mxu0 %v1800
      %v1802 = vand.u32 %v232, 4294901760
      %1803 = vmatpush.msra.mxu0 %v1802
      %v1804 = vand.u32 %v230, 4294901760
      %1805 = vmatpush.msra.mxu0 %v1804
      %v1806 = vand.u32 %v228, 4294901760
      %1807 = vmatpush.msra.mxu0 %v1806
      %v1808 = vand.u32 %v226, 4294901760
      %1809 = vmatpush.msra.mxu0 %v1808
      %v1810 = vand.u32 %v224, 4294901760
      %1811 = vmatpush.msra.mxu0 %v1810
      %v1812 = vand.u32 %v222, 4294901760
      %1813 = vmatpush.msra.mxu0 %v1812
      %v1814 = vand.u32 %v220, 4294901760
      %1815 = vmatpush.msra.mxu0 %v1814
      %v1816 = vand.u32 %v218, 4294901760
      %1817 = vmatpush.msra.mxu0 %v1816
      %v1818 = vand.u32 %v216, 4294901760
      %1819 = vmatpush.msra.mxu0 %v1818
      %v1820 = vand.u32 %v214, 4294901760
      %1821 = vmatpush.msra.mxu0 %v1820
      %v1822 = vand.u32 %v212, 4294901760
      %1823 = vmatpush.msra.mxu0 %v1822
      %v1824 = vand.u32 %v172, 4294901760
      %v1825 = vsub.f32 %v172, %v1824
      %v1826 = vand.u32 %v1825, 4294901760
      %1827 = vmatmul.f32.gmra.mxu0 %v1826
      %v1828 = vpop.f32.mrf.mxu0
      %v1829 = vadd.f32 %v1775, %v1828
      %v1830 = vand.u32 %v174, 4294901760
      %v1831 = vsub.f32 %v174, %v1830
      %v1832 = vand.u32 %v1831, 4294901760
      %1833 = vmatmul.f32.gmra.mxu0 %v1832
      %v1834 = vpop.f32.mrf.mxu0
      %v1835 = vadd.f32 %v1780, %v1834
      %v1836 = vand.u32 %v176, 4294901760
      %v1837 = vsub.f32 %v176, %v1836
      %v1838 = vand.u32 %v1837, 4294901760
      %1839 = vmatmul.f32.gmra.mxu0 %v1838
      %v1840 = vpop.f32.mrf.mxu0
      %v1841 = vadd.f32 %v1785, %v1840
      %v1842 = vand.u32 %v178, 4294901760
      %v1843 = vsub.f32 %v178, %v1842
      %v1844 = vand.u32 %v1843, 4294901760
      %1845 = vmatmul.f32.gmra.mxu0 %v1844
      %v1846 = vpop.f32.mrf.mxu0
      %v1847 = vadd.f32 %v1790, %v1846
      %1848 = vdwg.mxu0
      %v1849 = vand.u32 %v242, 4294901760
      %v1850 = vsub.f32 %v242, %v1849
      %v1851 = vand.u32 %v1850, 4294901760
      %1852 = vmatpush.msra.mxu0 %v1851
      %v1853 = vand.u32 %v240, 4294901760
      %v1854 = vsub.f32 %v240, %v1853
      %v1855 = vand.u32 %v1854, 4294901760
      %1856 = vmatpush.msra.mxu0 %v1855
      %v1857 = vand.u32 %v238, 4294901760
      %v1858 = vsub.f32 %v238, %v1857
      %v1859 = vand.u32 %v1858, 4294901760
      %1860 = vmatpush.msra.mxu0 %v1859
      %v1861 = vand.u32 %v236, 4294901760
      %v1862 = vsub.f32 %v236, %v1861
      %v1863 = vand.u32 %v1862, 4294901760
      %1864 = vmatpush.msra.mxu0 %v1863
      %v1865 = vand.u32 %v234, 4294901760
      %v1866 = vsub.f32 %v234, %v1865
      %v1867 = vand.u32 %v1866, 4294901760
      %1868 = vmatpush.msra.mxu0 %v1867
      %v1869 = vand.u32 %v232, 4294901760
      %v1870 = vsub.f32 %v232, %v1869
      %v1871 = vand.u32 %v1870, 4294901760
      %1872 = vmatpush.msra.mxu0 %v1871
      %v1873 = vand.u32 %v230, 4294901760
      %v1874 = vsub.f32 %v230, %v1873
      %v1875 = vand.u32 %v1874, 4294901760
      %1876 = vmatpush.msra.mxu0 %v1875
      %v1877 = vand.u32 %v228, 4294901760
      %v1878 = vsub.f32 %v228, %v1877
      %v1879 = vand.u32 %v1878, 4294901760
      %1880 = vmatpush.msra.mxu0 %v1879
      %v1881 = vand.u32 %v226, 4294901760
      %v1882 = vsub.f32 %v226, %v1881
      %v1883 = vand.u32 %v1882, 4294901760
      %1884 = vmatpush.msra.mxu0 %v1883
      %v1885 = vand.u32 %v224, 4294901760
      %v1886 = vsub.f32 %v224, %v1885
      %v1887 = vand.u32 %v1886, 4294901760
      %1888 = vmatpush.msra.mxu0 %v1887
      %v1889 = vand.u32 %v222, 4294901760
      %v1890 = vsub.f32 %v222, %v1889
      %v1891 = vand.u32 %v1890, 4294901760
      %1892 = vmatpush.msra.mxu0 %v1891
      %v1893 = vand.u32 %v220, 4294901760
      %v1894 = vsub.f32 %v220, %v1893
      %v1895 = vand.u32 %v1894, 4294901760
      %1896 = vmatpush.msra.mxu0 %v1895
      %v1897 = vand.u32 %v218, 4294901760
      %v1898 = vsub.f32 %v218, %v1897
      %v1899 = vand.u32 %v1898, 4294901760
      %1900 = vmatpush.msra.mxu0 %v1899
      %v1901 = vand.u32 %v216, 4294901760
      %v1902 = vsub.f32 %v216, %v1901
      %v1903 = vand.u32 %v1902, 4294901760
      %1904 = vmatpush.msra.mxu0 %v1903
      %v1905 = vand.u32 %v214, 4294901760
      %v1906 = vsub.f32 %v214, %v1905
      %v1907 = vand.u32 %v1906, 4294901760
      %1908 = vmatpush.msra.mxu0 %v1907
      %v1909 = vand.u32 %v212, 4294901760
      %v1910 = vsub.f32 %v212, %v1909
      %v1911 = vand.u32 %v1910, 4294901760
      %1912 = vmatpush.msra.mxu0 %v1911
      %v1913 = vand.u32 %v172, 4294901760
      %1914 = vmatmul.f32.gmra.mxu0 %v1913
      %v1915 = vpop.f32.mrf.mxu0
      %v1916 = vadd.f32 %v1829, %v1915
      %v1917 = vand.u32 %v174, 4294901760
      %1918 = vmatmul.f32.gmra.mxu0 %v1917
      %v1919 = vpop.f32.mrf.mxu0
      %v1920 = vadd.f32 %v1835, %v1919
      %v1921 = vand.u32 %v176, 4294901760
      %1922 = vmatmul.f32.gmra.mxu0 %v1921
      %v1923 = vpop.f32.mrf.mxu0
      %v1924 = vadd.f32 %v1841, %v1923
      %v1925 = vand.u32 %v178, 4294901760
      %1926 = vmatmul.f32.gmra.mxu0 %v1925
      %v1927 = vpop.f32.mrf.mxu0
      %v1928 = vadd.f32 %v1847, %v1927
      %1929 = vdwg.mxu0
      %v1930 = vand.u32 %v242, 4294901760
      %1931 = vmatpush.msra.mxu0 %v1930
      %v1932 = vand.u32 %v240, 4294901760
      %1933 = vmatpush.msra.mxu0 %v1932
      %v1934 = vand.u32 %v238, 4294901760
      %1935 = vmatpush.msra.mxu0 %v1934
      %v1936 = vand.u32 %v236, 4294901760
      %1937 = vmatpush.msra.mxu0 %v1936
      %v1938 = vand.u32 %v234, 4294901760
      %1939 = vmatpush.msra.mxu0 %v1938
      %v1940 = vand.u32 %v232, 4294901760
      %1941 = vmatpush.msra.mxu0 %v1940
      %v1942 = vand.u32 %v230, 4294901760
      %1943 = vmatpush.msra.mxu0 %v1942
      %v1944 = vand.u32 %v228, 4294901760
      %1945 = vmatpush.msra.mxu0 %v1944
      %v1946 = vand.u32 %v226, 4294901760
      %1947 = vmatpush.msra.mxu0 %v1946
      %v1948 = vand.u32 %v224, 4294901760
      %1949 = vmatpush.msra.mxu0 %v1948
      %v1950 = vand.u32 %v222, 4294901760
      %1951 = vmatpush.msra.mxu0 %v1950
      %v1952 = vand.u32 %v220, 4294901760
      %1953 = vmatpush.msra.mxu0 %v1952
      %v1954 = vand.u32 %v218, 4294901760
      %1955 = vmatpush.msra.mxu0 %v1954
      %v1956 = vand.u32 %v216, 4294901760
      %1957 = vmatpush.msra.mxu0 %v1956
      %v1958 = vand.u32 %v214, 4294901760
      %1959 = vmatpush.msra.mxu0 %v1958
      %v1960 = vand.u32 %v212, 4294901760
      %1961 = vmatpush.msra.mxu0 %v1960
      %v1962 = vand.u32 %v172, 4294901760
      %1963 = vmatmul.f32.gmra.mxu0 %v1962
      %v1964 = vpop.f32.mrf.mxu0
      %v1965 = vadd.f32 %v1916, %v1964
      %v1966 = vand.u32 %v174, 4294901760
      %1967 = vmatmul.f32.gmra.mxu0 %v1966
      %v1968 = vpop.f32.mrf.mxu0
      %v1969 = vadd.f32 %v1920, %v1968
      %v1970 = vand.u32 %v176, 4294901760
      %1971 = vmatmul.f32.gmra.mxu0 %v1970
      %v1972 = vpop.f32.mrf.mxu0
      %v1973 = vadd.f32 %v1924, %v1972
      %v1974 = vand.u32 %v178, 4294901760
      %1975 = vmatmul.f32.gmra.mxu0 %v1974
      %v1976 = vpop.f32.mrf.mxu0
      %v1977 = vadd.f32 %v1928, %v1976
      %1978 = vdwg.mxu0
      %v1979 = vld [vmem:[%s1] sm:$0xff]
      %v1980 = vld [vmem:[%s1 + $0x8] sm:$0xff]
      %v1981 = vld [vmem:[%s1 + $0x10] sm:$0xff]
      %v1982 = vld [vmem:[%s1 + $0x18] sm:$0xff]
      %vm1983 = vcmask 261120
      %v1985 = vsel %vm1983, %v1979, 0
      %v1988 = vsel %vm1983, %v1980, 0
      %v1991 = vsel %vm1983, %v1981, 0
      %v1994 = vsel %vm1983, %v1982, 0
      %1996 = vmatpush.msra.mxu0 0.0
      %1997 = vmatpush.msra.mxu0 0.0
      %1998 = vmatpush.msra.mxu0 0.0
      %1999 = vmatpush.msra.mxu0 0.0
      %2000 = vmatpush.msra.mxu0 0.0
      %2001 = vmatpush.msra.mxu0 0.0
      %2002 = vmatpush.msra.mxu0 0.0
      %2003 = vmatpush.msra.mxu0 0.0
      %2004 = vmatpush.msra.mxu0 0.0
      %2005 = vmatpush.msra.mxu0 0.0
      %2006 = vmatpush.msra.mxu0 0.0
      %2007 = vmatpush.msra.mxu0 0.0
      %v2008 = vand.u32 %v1109, 4294901760
      %2009 = vmatpush.msra.mxu0 %v2008
      %v2010 = vand.u32 %v1105, 4294901760
      %2011 = vmatpush.msra.mxu0 %v2010
      %v2012 = vand.u32 %v1101, 4294901760
      %2013 = vmatpush.msra.mxu0 %v2012
      %v2014 = vand.u32 %v1097, 4294901760
      %2015 = vmatpush.msra.mxu0 %v2014
      %v2016 = vand.u32 %v1985, 4294901760
      %v2017 = vsub.f32 %v1985, %v2016
      %v2018 = vand.u32 %v2017, 4294901760
      %v2019 = vsub.f32 %v2017, %v2018
      %v2020 = vand.u32 %v2019, 4294901760
      %2021 = vmatmul.f32.gmra.mxu0 %v2020
      %v2022 = vpop.f32.mrf.mxu0
      %v2023 = vadd.f32 0.0, %v2022
      %v2024 = vand.u32 %v1988, 4294901760
      %v2025 = vsub.f32 %v1988, %v2024
      %v2026 = vand.u32 %v2025, 4294901760
      %v2027 = vsub.f32 %v2025, %v2026
      %v2028 = vand.u32 %v2027, 4294901760
      %2029 = vmatmul.f32.gmra.mxu0 %v2028
      %v2030 = vpop.f32.mrf.mxu0
      %v2031 = vadd.f32 0.0, %v2030
      %v2032 = vand.u32 %v1991, 4294901760
      %v2033 = vsub.f32 %v1991, %v2032
      %v2034 = vand.u32 %v2033, 4294901760
      %v2035 = vsub.f32 %v2033, %v2034
      %v2036 = vand.u32 %v2035, 4294901760
      %2037 = vmatmul.f32.gmra.mxu0 %v2036
      %v2038 = vpop.f32.mrf.mxu0
      %v2039 = vadd.f32 0.0, %v2038
      %v2040 = vand.u32 %v1994, 4294901760
      %v2041 = vsub.f32 %v1994, %v2040
      %v2042 = vand.u32 %v2041, 4294901760
      %v2043 = vsub.f32 %v2041, %v2042
      %v2044 = vand.u32 %v2043, 4294901760
      %2045 = vmatmul.f32.gmra.mxu0 %v2044
      %v2046 = vpop.f32.mrf.mxu0
      %v2047 = vadd.f32 0.0, %v2046
      %2048 = vdwg.mxu0
      %2049 = vmatpush.msra.mxu0 0.0
      %2050 = vmatpush.msra.mxu0 0.0
      %2051 = vmatpush.msra.mxu0 0.0
      %2052 = vmatpush.msra.mxu0 0.0
      %2053 = vmatpush.msra.mxu0 0.0
      %2054 = vmatpush.msra.mxu0 0.0
      %2055 = vmatpush.msra.mxu0 0.0
      %2056 = vmatpush.msra.mxu0 0.0
      %2057 = vmatpush.msra.mxu0 0.0
      %2058 = vmatpush.msra.mxu0 0.0
      %2059 = vmatpush.msra.mxu0 0.0
      %2060 = vmatpush.msra.mxu0 0.0
      %v2061 = vand.u32 %v1109, 4294901760
      %v2062 = vsub.f32 %v1109, %v2061
      %v2063 = vand.u32 %v2062, 4294901760
      %v2064 = vsub.f32 %v2062, %v2063
      %v2065 = vand.u32 %v2064, 4294901760
      %2066 = vmatpush.msra.mxu0 %v2065
      %v2067 = vand.u32 %v1105, 4294901760
      %v2068 = vsub.f32 %v1105, %v2067
      %v2069 = vand.u32 %v2068, 4294901760
      %v2070 = vsub.f32 %v2068, %v2069
      %v2071 = vand.u32 %v2070, 4294901760
      %2072 = vmatpush.msra.mxu0 %v2071
      %v2073 = vand.u32 %v1101, 4294901760
      %v2074 = vsub.f32 %v1101, %v2073
      %v2075 = vand.u32 %v2074, 4294901760
      %v2076 = vsub.f32 %v2074, %v2075
      %v2077 = vand.u32 %v2076, 4294901760
      %2078 = vmatpush.msra.mxu0 %v2077
      %v2079 = vand.u32 %v1097, 4294901760
      %v2080 = vsub.f32 %v1097, %v2079
      %v2081 = vand.u32 %v2080, 4294901760
      %v2082 = vsub.f32 %v2080, %v2081
      %v2083 = vand.u32 %v2082, 4294901760
      %2084 = vmatpush.msra.mxu0 %v2083
      %v2085 = vand.u32 %v1985, 4294901760
      %2086 = vmatmul.f32.gmra.mxu0 %v2085
      %v2087 = vpop.f32.mrf.mxu0
      %v2088 = vadd.f32 %v2023, %v2087
      %v2089 = vand.u32 %v1988, 4294901760
      %2090 = vmatmul.f32.gmra.mxu0 %v2089
      %v2091 = vpop.f32.mrf.mxu0
      %v2092 = vadd.f32 %v2031, %v2091
      %v2093 = vand.u32 %v1991, 4294901760
      %2094 = vmatmul.f32.gmra.mxu0 %v2093
      %v2095 = vpop.f32.mrf.mxu0
      %v2096 = vadd.f32 %v2039, %v2095
      %v2097 = vand.u32 %v1994, 4294901760
      %2098 = vmatmul.f32.gmra.mxu0 %v2097
      %v2099 = vpop.f32.mrf.mxu0
      %v2100 = vadd.f32 %v2047, %v2099
      %2101 = vdwg.mxu0
      %2102 = vmatpush.msra.mxu0 0.0
      %2103 = vmatpush.msra.mxu0 0.0
      %2104 = vmatpush.msra.mxu0 0.0
      %2105 = vmatpush.msra.mxu0 0.0
      %2106 = vmatpush.msra.mxu0 0.0
      %2107 = vmatpush.msra.mxu0 0.0
      %2108 = vmatpush.msra.mxu0 0.0
      %2109 = vmatpush.msra.mxu0 0.0
      %2110 = vmatpush.msra.mxu0 0.0
      %2111 = vmatpush.msra.mxu0 0.0
      %2112 = vmatpush.msra.mxu0 0.0
      %2113 = vmatpush.msra.mxu0 0.0
      %v2114 = vand.u32 %v1109, 4294901760
      %v2115 = vsub.f32 %v1109, %v2114
      %2116 = vmatpush.msra.mxu0 %v2115
      %v2117 = vand.u32 %v1105, 4294901760
      %v2118 = vsub.f32 %v1105, %v2117
      %2119 = vmatpush.msra.mxu0 %v2118
      %v2120 = vand.u32 %v1101, 4294901760
      %v2121 = vsub.f32 %v1101, %v2120
      %2122 = vmatpush.msra.mxu0 %v2121
      %v2123 = vand.u32 %v1097, 4294901760
      %v2124 = vsub.f32 %v1097, %v2123
      %2125 = vmatpush.msra.mxu0 %v2124
      %v2126 = vand.u32 %v1985, 4294901760
      %v2127 = vsub.f32 %v1985, %v2126
      %2128 = vmatmul.f32.gmra.mxu0 %v2127
      %v2129 = vpop.f32.mrf.mxu0
      %v2130 = vadd.f32 %v2088, %v2129
      %v2131 = vand.u32 %v1988, 4294901760
      %v2132 = vsub.f32 %v1988, %v2131
      %2133 = vmatmul.f32.gmra.mxu0 %v2132
      %v2134 = vpop.f32.mrf.mxu0
      %v2135 = vadd.f32 %v2092, %v2134
      %v2136 = vand.u32 %v1991, 4294901760
      %v2137 = vsub.f32 %v1991, %v2136
      %2138 = vmatmul.f32.gmra.mxu0 %v2137
      %v2139 = vpop.f32.mrf.mxu0
      %v2140 = vadd.f32 %v2096, %v2139
      %v2141 = vand.u32 %v1994, 4294901760
      %v2142 = vsub.f32 %v1994, %v2141
      %2143 = vmatmul.f32.gmra.mxu0 %v2142
      %v2144 = vpop.f32.mrf.mxu0
      %v2145 = vadd.f32 %v2100, %v2144
      %2146 = vdwg.mxu0
      %2147 = vmatpush.msra.mxu0 0.0
      %2148 = vmatpush.msra.mxu0 0.0
      %2149 = vmatpush.msra.mxu0 0.0
      %2150 = vmatpush.msra.mxu0 0.0
      %2151 = vmatpush.msra.mxu0 0.0
      %2152 = vmatpush.msra.mxu0 0.0
      %2153 = vmatpush.msra.mxu0 0.0
      %2154 = vmatpush.msra.mxu0 0.0
      %2155 = vmatpush.msra.mxu0 0.0
      %2156 = vmatpush.msra.mxu0 0.0
      %2157 = vmatpush.msra.mxu0 0.0
      %2158 = vmatpush.msra.mxu0 0.0
      %v2159 = vand.u32 %v1109, 4294901760
      %2160 = vmatpush.msra.mxu0 %v2159
      %v2161 = vand.u32 %v1105, 4294901760
      %2162 = vmatpush.msra.mxu0 %v2161
      %v2163 = vand.u32 %v1101, 4294901760
      %2164 = vmatpush.msra.mxu0 %v2163
      %v2165 = vand.u32 %v1097, 4294901760
      %2166 = vmatpush.msra.mxu0 %v2165
      %v2167 = vand.u32 %v1985, 4294901760
      %v2168 = vsub.f32 %v1985, %v2167
      %v2169 = vand.u32 %v2168, 4294901760
      %2170 = vmatmul.f32.gmra.mxu0 %v2169
      %v2171 = vpop.f32.mrf.mxu0
      %v2172 = vadd.f32 %v2130, %v2171
      %v2173 = vand.u32 %v1988, 4294901760
      %v2174 = vsub.f32 %v1988, %v2173
      %v2175 = vand.u32 %v2174, 4294901760
      %2176 = vmatmul.f32.gmra.mxu0 %v2175
      %v2177 = vpop.f32.mrf.mxu0
      %v2178 = vadd.f32 %v2135, %v2177
      %v2179 = vand.u32 %v1991, 4294901760
      %v2180 = vsub.f32 %v1991, %v2179
      %v2181 = vand.u32 %v2180, 4294901760
      %2182 = vmatmul.f32.gmra.mxu0 %v2181
      %v2183 = vpop.f32.mrf.mxu0
      %v2184 = vadd.f32 %v2140, %v2183
      %v2185 = vand.u32 %v1994, 4294901760
      %v2186 = vsub.f32 %v1994, %v2185
      %v2187 = vand.u32 %v2186, 4294901760
      %2188 = vmatmul.f32.gmra.mxu0 %v2187
      %v2189 = vpop.f32.mrf.mxu0
      %v2190 = vadd.f32 %v2145, %v2189
      %2191 = vdwg.mxu0
      %2192 = vmatpush.msra.mxu0 0.0
      %2193 = vmatpush.msra.mxu0 0.0
      %2194 = vmatpush.msra.mxu0 0.0
      %2195 = vmatpush.msra.mxu0 0.0
      %2196 = vmatpush.msra.mxu0 0.0
      %2197 = vmatpush.msra.mxu0 0.0
      %2198 = vmatpush.msra.mxu0 0.0
      %2199 = vmatpush.msra.mxu0 0.0
      %2200 = vmatpush.msra.mxu0 0.0
      %2201 = vmatpush.msra.mxu0 0.0
      %2202 = vmatpush.msra.mxu0 0.0
      %2203 = vmatpush.msra.mxu0 0.0
      %v2204 = vand.u32 %v1109, 4294901760
      %v2205 = vsub.f32 %v1109, %v2204
      %v2206 = vand.u32 %v2205, 4294901760
      %2207 = vmatpush.msra.mxu0 %v2206
      %v2208 = vand.u32 %v1105, 4294901760
      %v2209 = vsub.f32 %v1105, %v2208
      %v2210 = vand.u32 %v2209, 4294901760
      %2211 = vmatpush.msra.mxu0 %v2210
      %v2212 = vand.u32 %v1101, 4294901760
      %v2213 = vsub.f32 %v1101, %v2212
      %v2214 = vand.u32 %v2213, 4294901760
      %2215 = vmatpush.msra.mxu0 %v2214
      %v2216 = vand.u32 %v1097, 4294901760
      %v2217 = vsub.f32 %v1097, %v2216
      %v2218 = vand.u32 %v2217, 4294901760
      %2219 = vmatpush.msra.mxu0 %v2218
      %v2220 = vand.u32 %v1985, 4294901760
      %2221 = vmatmul.f32.gmra.mxu0 %v2220
      %v2222 = vpop.f32.mrf.mxu0
      %v2223 = vadd.f32 %v2172, %v2222
      %v2224 = vand.u32 %v1988, 4294901760
      %2225 = vmatmul.f32.gmra.mxu0 %v2224
      %v2226 = vpop.f32.mrf.mxu0
      %v2227 = vadd.f32 %v2178, %v2226
      %v2228 = vand.u32 %v1991, 4294901760
      %2229 = vmatmul.f32.gmra.mxu0 %v2228
      %v2230 = vpop.f32.mrf.mxu0
      %v2231 = vadd.f32 %v2184, %v2230
      %v2232 = vand.u32 %v1994, 4294901760
      %2233 = vmatmul.f32.gmra.mxu0 %v2232
      %v2234 = vpop.f32.mrf.mxu0
      %v2235 = vadd.f32 %v2190, %v2234
      %2236 = vdwg.mxu0
      %2237 = vmatpush.msra.mxu0 0.0
      %2238 = vmatpush.msra.mxu0 0.0
      %2239 = vmatpush.msra.mxu0 0.0
      %2240 = vmatpush.msra.mxu0 0.0
      %2241 = vmatpush.msra.mxu0 0.0
      %2242 = vmatpush.msra.mxu0 0.0
      %2243 = vmatpush.msra.mxu0 0.0
      %2244 = vmatpush.msra.mxu0 0.0
      %2245 = vmatpush.msra.mxu0 0.0
      %2246 = vmatpush.msra.mxu0 0.0
      %2247 = vmatpush.msra.mxu0 0.0
      %2248 = vmatpush.msra.mxu0 0.0
      %v2249 = vand.u32 %v1109, 4294901760
      %2250 = vmatpush.msra.mxu0 %v2249
      %v2251 = vand.u32 %v1105, 4294901760
      %2252 = vmatpush.msra.mxu0 %v2251
      %v2253 = vand.u32 %v1101, 4294901760
      %2254 = vmatpush.msra.mxu0 %v2253
      %v2255 = vand.u32 %v1097, 4294901760
      %2256 = vmatpush.msra.mxu0 %v2255
      %v2257 = vand.u32 %v1985, 4294901760
      %2258 = vmatmul.f32.gmra.mxu0 %v2257
      %v2259 = vpop.f32.mrf.mxu0
      %v2260 = vadd.f32 %v2223, %v2259
      %v2261 = vand.u32 %v1988, 4294901760
      %2262 = vmatmul.f32.gmra.mxu0 %v2261
      %v2263 = vpop.f32.mrf.mxu0
      %v2264 = vadd.f32 %v2227, %v2263
      %v2265 = vand.u32 %v1991, 4294901760
      %2266 = vmatmul.f32.gmra.mxu0 %v2265
      %v2267 = vpop.f32.mrf.mxu0
      %v2268 = vadd.f32 %v2231, %v2267
      %v2269 = vand.u32 %v1994, 4294901760
      %2270 = vmatmul.f32.gmra.mxu0 %v2269
      %v2271 = vpop.f32.mrf.mxu0
      %v2272 = vadd.f32 %v2235, %v2271
      %2273 = vdwg.mxu0
      %2274 = vmatpush.msra.mxu0 0.0
      %2275 = vmatpush.msra.mxu0 0.0
      %2276 = vmatpush.msra.mxu0 0.0
      %2277 = vmatpush.msra.mxu0 0.0
      %2278 = vmatpush.msra.mxu0 0.0
      %2279 = vmatpush.msra.mxu0 0.0
      %2280 = vmatpush.msra.mxu0 0.0
      %2281 = vmatpush.msra.mxu0 0.0
      %2282 = vmatpush.msra.mxu0 0.0
      %2283 = vmatpush.msra.mxu0 0.0
      %2284 = vmatpush.msra.mxu0 0.0
      %2285 = vmatpush.msra.mxu0 0.0
      %v2286 = vand.u32 %v1977, 4294901760
      %2287 = vmatpush.msra.mxu0 %v2286
      %v2288 = vand.u32 %v1973, 4294901760
      %2289 = vmatpush.msra.mxu0 %v2288
      %v2290 = vand.u32 %v1969, 4294901760
      %2291 = vmatpush.msra.mxu0 %v2290
      %v2292 = vand.u32 %v1965, 4294901760
      %2293 = vmatpush.msra.mxu0 %v2292
      %v2294 = vand.u32 %v1985, 4294901760
      %v2295 = vsub.f32 %v1985, %v2294
      %v2296 = vand.u32 %v2295, 4294901760
      %v2297 = vsub.f32 %v2295, %v2296
      %v2298 = vand.u32 %v2297, 4294901760
      %2299 = vmatmul.f32.gmra.mxu0 %v2298
      %v2300 = vpop.f32.mrf.mxu0
      %v2301 = vadd.f32 0.0, %v2300
      %v2302 = vand.u32 %v1988, 4294901760
      %v2303 = vsub.f32 %v1988, %v2302
      %v2304 = vand.u32 %v2303, 4294901760
      %v2305 = vsub.f32 %v2303, %v2304
      %v2306 = vand.u32 %v2305, 4294901760
      %2307 = vmatmul.f32.gmra.mxu0 %v2306
      %v2308 = vpop.f32.mrf.mxu0
      %v2309 = vadd.f32 0.0, %v2308
      %v2310 = vand.u32 %v1991, 4294901760
      %v2311 = vsub.f32 %v1991, %v2310
      %v2312 = vand.u32 %v2311, 4294901760
      %v2313 = vsub.f32 %v2311, %v2312
      %v2314 = vand.u32 %v2313, 4294901760
      %2315 = vmatmul.f32.gmra.mxu0 %v2314
      %v2316 = vpop.f32.mrf.mxu0
      %v2317 = vadd.f32 0.0, %v2316
      %v2318 = vand.u32 %v1994, 4294901760
      %v2319 = vsub.f32 %v1994, %v2318
      %v2320 = vand.u32 %v2319, 4294901760
      %v2321 = vsub.f32 %v2319, %v2320
      %v2322 = vand.u32 %v2321, 4294901760
      %2323 = vmatmul.f32.gmra.mxu0 %v2322
      %v2324 = vpop.f32.mrf.mxu0
      %v2325 = vadd.f32 0.0, %v2324
      %2326 = vdwg.mxu0
      %2327 = vmatpush.msra.mxu0 0.0
      %2328 = vmatpush.msra.mxu0 0.0
      %2329 = vmatpush.msra.mxu0 0.0
      %2330 = vmatpush.msra.mxu0 0.0
      %2331 = vmatpush.msra.mxu0 0.0
      %2332 = vmatpush.msra.mxu0 0.0
      %2333 = vmatpush.msra.mxu0 0.0
      %2334 = vmatpush.msra.mxu0 0.0
      %2335 = vmatpush.msra.mxu0 0.0
      %2336 = vmatpush.msra.mxu0 0.0
      %2337 = vmatpush.msra.mxu0 0.0
      %2338 = vmatpush.msra.mxu0 0.0
      %v2339 = vand.u32 %v1977, 4294901760
      %v2340 = vsub.f32 %v1977, %v2339
      %v2341 = vand.u32 %v2340, 4294901760
      %v2342 = vsub.f32 %v2340, %v2341
      %v2343 = vand.u32 %v2342, 4294901760
      %2344 = vmatpush.msra.mxu0 %v2343
      %v2345 = vand.u32 %v1973, 4294901760
      %v2346 = vsub.f32 %v1973, %v2345
      %v2347 = vand.u32 %v2346, 4294901760
      %v2348 = vsub.f32 %v2346, %v2347
      %v2349 = vand.u32 %v2348, 4294901760
      %2350 = vmatpush.msra.mxu0 %v2349
      %v2351 = vand.u32 %v1969, 4294901760
      %v2352 = vsub.f32 %v1969, %v2351
      %v2353 = vand.u32 %v2352, 4294901760
      %v2354 = vsub.f32 %v2352, %v2353
      %v2355 = vand.u32 %v2354, 4294901760
      %2356 = vmatpush.msra.mxu0 %v2355
      %v2357 = vand.u32 %v1965, 4294901760
      %v2358 = vsub.f32 %v1965, %v2357
      %v2359 = vand.u32 %v2358, 4294901760
      %v2360 = vsub.f32 %v2358, %v2359
      %v2361 = vand.u32 %v2360, 4294901760
      %2362 = vmatpush.msra.mxu0 %v2361
      %v2363 = vand.u32 %v1985, 4294901760
      %2364 = vmatmul.f32.gmra.mxu0 %v2363
      %v2365 = vpop.f32.mrf.mxu0
      %v2366 = vadd.f32 %v2301, %v2365
      %v2367 = vand.u32 %v1988, 4294901760
      %2368 = vmatmul.f32.gmra.mxu0 %v2367
      %v2369 = vpop.f32.mrf.mxu0
      %v2370 = vadd.f32 %v2309, %v2369
      %v2371 = vand.u32 %v1991, 4294901760
      %2372 = vmatmul.f32.gmra.mxu0 %v2371
      %v2373 = vpop.f32.mrf.mxu0
      %v2374 = vadd.f32 %v2317, %v2373
      %v2375 = vand.u32 %v1994, 4294901760
      %2376 = vmatmul.f32.gmra.mxu0 %v2375
      %v2377 = vpop.f32.mrf.mxu0
      %v2378 = vadd.f32 %v2325, %v2377
      %2379 = vdwg.mxu0
      %2380 = vmatpush.msra.mxu0 0.0
      %2381 = vmatpush.msra.mxu0 0.0
      %2382 = vmatpush.msra.mxu0 0.0
      %2383 = vmatpush.msra.mxu0 0.0
      %2384 = vmatpush.msra.mxu0 0.0
      %2385 = vmatpush.msra.mxu0 0.0
      %2386 = vmatpush.msra.mxu0 0.0
      %2387 = vmatpush.msra.mxu0 0.0
      %2388 = vmatpush.msra.mxu0 0.0
      %2389 = vmatpush.msra.mxu0 0.0
      %2390 = vmatpush.msra.mxu0 0.0
      %2391 = vmatpush.msra.mxu0 0.0
      %v2392 = vand.u32 %v1977, 4294901760
      %v2393 = vsub.f32 %v1977, %v2392
      %2394 = vmatpush.msra.mxu0 %v2393
      %v2395 = vand.u32 %v1973, 4294901760
      %v2396 = vsub.f32 %v1973, %v2395
      %2397 = vmatpush.msra.mxu0 %v2396
      %v2398 = vand.u32 %v1969, 4294901760
      %v2399 = vsub.f32 %v1969, %v2398
      %2400 = vmatpush.msra.mxu0 %v2399
      %v2401 = vand.u32 %v1965, 4294901760
      %v2402 = vsub.f32 %v1965, %v2401
      %2403 = vmatpush.msra.mxu0 %v2402
      %v2404 = vand.u32 %v1985, 4294901760
      %v2405 = vsub.f32 %v1985, %v2404
      %2406 = vmatmul.f32.gmra.mxu0 %v2405
      %v2407 = vpop.f32.mrf.mxu0
      %v2408 = vadd.f32 %v2366, %v2407
      %v2409 = vand.u32 %v1988, 4294901760
      %v2410 = vsub.f32 %v1988, %v2409
      %2411 = vmatmul.f32.gmra.mxu0 %v2410
      %v2412 = vpop.f32.mrf.mxu0
      %v2413 = vadd.f32 %v2370, %v2412
      %v2414 = vand.u32 %v1991, 4294901760
      %v2415 = vsub.f32 %v1991, %v2414
      %2416 = vmatmul.f32.gmra.mxu0 %v2415
      %v2417 = vpop.f32.mrf.mxu0
      %v2418 = vadd.f32 %v2374, %v2417
      %v2419 = vand.u32 %v1994, 4294901760
      %v2420 = vsub.f32 %v1994, %v2419
      %2421 = vmatmul.f32.gmra.mxu0 %v2420
      %v2422 = vpop.f32.mrf.mxu0
      %v2423 = vadd.f32 %v2378, %v2422
      %2424 = vdwg.mxu0
      %2425 = vmatpush.msra.mxu0 0.0
      %2426 = vmatpush.msra.mxu0 0.0
      %2427 = vmatpush.msra.mxu0 0.0
      %2428 = vmatpush.msra.mxu0 0.0
      %2429 = vmatpush.msra.mxu0 0.0
      %2430 = vmatpush.msra.mxu0 0.0
      %2431 = vmatpush.msra.mxu0 0.0
      %2432 = vmatpush.msra.mxu0 0.0
      %2433 = vmatpush.msra.mxu0 0.0
      %2434 = vmatpush.msra.mxu0 0.0
      %2435 = vmatpush.msra.mxu0 0.0
      %2436 = vmatpush.msra.mxu0 0.0
      %v2437 = vand.u32 %v1977, 4294901760
      %2438 = vmatpush.msra.mxu0 %v2437
      %v2439 = vand.u32 %v1973, 4294901760
      %2440 = vmatpush.msra.mxu0 %v2439
      %v2441 = vand.u32 %v1969, 4294901760
      %2442 = vmatpush.msra.mxu0 %v2441
      %v2443 = vand.u32 %v1965, 4294901760
      %2444 = vmatpush.msra.mxu0 %v2443
      %v2445 = vand.u32 %v1985, 4294901760
      %v2446 = vsub.f32 %v1985, %v2445
      %v2447 = vand.u32 %v2446, 4294901760
      %2448 = vmatmul.f32.gmra.mxu0 %v2447
      %v2449 = vpop.f32.mrf.mxu0
      %v2450 = vadd.f32 %v2408, %v2449
      %v2451 = vand.u32 %v1988, 4294901760
      %v2452 = vsub.f32 %v1988, %v2451
      %v2453 = vand.u32 %v2452, 4294901760
      %2454 = vmatmul.f32.gmra.mxu0 %v2453
      %v2455 = vpop.f32.mrf.mxu0
      %v2456 = vadd.f32 %v2413, %v2455
      %v2457 = vand.u32 %v1991, 4294901760
      %v2458 = vsub.f32 %v1991, %v2457
      %v2459 = vand.u32 %v2458, 4294901760
      %2460 = vmatmul.f32.gmra.mxu0 %v2459
      %v2461 = vpop.f32.mrf.mxu0
      %v2462 = vadd.f32 %v2418, %v2461
      %v2463 = vand.u32 %v1994, 4294901760
      %v2464 = vsub.f32 %v1994, %v2463
      %v2465 = vand.u32 %v2464, 4294901760
      %2466 = vmatmul.f32.gmra.mxu0 %v2465
      %v2467 = vpop.f32.mrf.mxu0
      %v2468 = vadd.f32 %v2423, %v2467
      %2469 = vdwg.mxu0
      %2470 = vmatpush.msra.mxu0 0.0
      %2471 = vmatpush.msra.mxu0 0.0
      %2472 = vmatpush.msra.mxu0 0.0
      %2473 = vmatpush.msra.mxu0 0.0
      %2474 = vmatpush.msra.mxu0 0.0
      %2475 = vmatpush.msra.mxu0 0.0
      %2476 = vmatpush.msra.mxu0 0.0
      %2477 = vmatpush.msra.mxu0 0.0
      %2478 = vmatpush.msra.mxu0 0.0
      %2479 = vmatpush.msra.mxu0 0.0
      %2480 = vmatpush.msra.mxu0 0.0
      %2481 = vmatpush.msra.mxu0 0.0
      %v2482 = vand.u32 %v1977, 4294901760
      %v2483 = vsub.f32 %v1977, %v2482
      %v2484 = vand.u32 %v2483, 4294901760
      %2485 = vmatpush.msra.mxu0 %v2484
      %v2486 = vand.u32 %v1973, 4294901760
      %v2487 = vsub.f32 %v1973, %v2486
      %v2488 = vand.u32 %v2487, 4294901760
      %2489 = vmatpush.msra.mxu0 %v2488
      %v2490 = vand.u32 %v1969, 4294901760
      %v2491 = vsub.f32 %v1969, %v2490
      %v2492 = vand.u32 %v2491, 4294901760
      %2493 = vmatpush.msra.mxu0 %v2492
      %v2494 = vand.u32 %v1965, 4294901760
      %v2495 = vsub.f32 %v1965, %v2494
      %v2496 = vand.u32 %v2495, 4294901760
      %2497 = vmatpush.msra.mxu0 %v2496
      %v2498 = vand.u32 %v1985, 4294901760
      %2499 = vmatmul.f32.gmra.mxu0 %v2498
      %v2500 = vpop.f32.mrf.mxu0
      %v2501 = vadd.f32 %v2450, %v2500
      %v2502 = vand.u32 %v1988, 4294901760
      %2503 = vmatmul.f32.gmra.mxu0 %v2502
      %v2504 = vpop.f32.mrf.mxu0
      %v2505 = vadd.f32 %v2456, %v2504
      %v2506 = vand.u32 %v1991, 4294901760
      %2507 = vmatmul.f32.gmra.mxu0 %v2506
      %v2508 = vpop.f32.mrf.mxu0
      %v2509 = vadd.f32 %v2462, %v2508
      %v2510 = vand.u32 %v1994, 4294901760
      %2511 = vmatmul.f32.gmra.mxu0 %v2510
      %v2512 = vpop.f32.mrf.mxu0
      %v2513 = vadd.f32 %v2468, %v2512
      %2514 = vdwg.mxu0
      %2515 = vmatpush.msra.mxu0 0.0
      %2516 = vmatpush.msra.mxu0 0.0
      %2517 = vmatpush.msra.mxu0 0.0
      %2518 = vmatpush.msra.mxu0 0.0
      %2519 = vmatpush.msra.mxu0 0.0
      %2520 = vmatpush.msra.mxu0 0.0
      %2521 = vmatpush.msra.mxu0 0.0
      %2522 = vmatpush.msra.mxu0 0.0
      %2523 = vmatpush.msra.mxu0 0.0
      %2524 = vmatpush.msra.mxu0 0.0
      %2525 = vmatpush.msra.mxu0 0.0
      %2526 = vmatpush.msra.mxu0 0.0
      %v2527 = vand.u32 %v1977, 4294901760
      %2528 = vmatpush.msra.mxu0 %v2527
      %v2529 = vand.u32 %v1973, 4294901760
      %2530 = vmatpush.msra.mxu0 %v2529
      %v2531 = vand.u32 %v1969, 4294901760
      %2532 = vmatpush.msra.mxu0 %v2531
      %v2533 = vand.u32 %v1965, 4294901760
      %2534 = vmatpush.msra.mxu0 %v2533
      %v2535 = vand.u32 %v1985, 4294901760
      %2536 = vmatmul.f32.gmra.mxu0 %v2535
      %v2537 = vpop.f32.mrf.mxu0
      %v2538 = vadd.f32 %v2501, %v2537
      %v2539 = vand.u32 %v1988, 4294901760
      %2540 = vmatmul.f32.gmra.mxu0 %v2539
      %v2541 = vpop.f32.mrf.mxu0
      %v2542 = vadd.f32 %v2505, %v2541
      %v2543 = vand.u32 %v1991, 4294901760
      %2544 = vmatmul.f32.gmra.mxu0 %v2543
      %v2545 = vpop.f32.mrf.mxu0
      %v2546 = vadd.f32 %v2509, %v2545
      %v2547 = vand.u32 %v1994, 4294901760
      %2548 = vmatmul.f32.gmra.mxu0 %v2547
      %v2549 = vpop.f32.mrf.mxu0
      %v2550 = vadd.f32 %v2513, %v2549
      %2551 = vdwg.mxu0
      %v2552 = vadd.f32 %v171, %v2260
      %v2553 = vadd.f32 %v172, %v2538
      %v2554 = vadd.f32 %v173, %v2264
      %v2555 = vadd.f32 %v174, %v2542
      %v2556 = vadd.f32 %v175, %v2268
      %v2557 = vadd.f32 %v176, %v2546
      %v2558 = vadd.f32 %v177, %v2272
      %v2559 = vadd.f32 %v178, %v2550
      %2560 = vst [vmem:[%s170] sm:$0xff] %v2552
      %2561 = vst [vmem:[%s170 + $0x8] sm:$0xff] %v2553
      %2562 = vst [vmem:[%s170 + $0x10] sm:$0xff] %v2554
      %2563 = vst [vmem:[%s170 + $0x18] sm:$0xff] %v2555
      %2564 = vst [vmem:[%s170 + $0x20] sm:$0xff] %v2556
      %2565 = vst [vmem:[%s170 + $0x28] sm:$0xff] %v2557
      %2566 = vst [vmem:[%s170 + $0x30] sm:$0xff] %v2558
      %2567 = vst [vmem:[%s170 + $0x38] sm:$0xff] %v2559
      %p2568 = scmp.lt.s32.totalorder %s14, 1
      %s2569 = scalar_select %p2568, %s14, 1
      %s2570 = smul.addr %s2569, 8
      %s2571 = smul.addr %s2570, 8
      %s2572 = scalar_lea.vmem %s3, %s2571
      // Predicated region
      $region33: #{temporal_aggregate.1} parent=31 // pred_check
        %p2573 = pneg %p100
      $region34: #{temporal_aggregate.1} parent=31 // pred_check_branch
        %2575 = sbr.rel (%p2573) target = $region36
      $region35: #{temporal_aggregate.1} parent=31 // pred_region
        _
      $region36: #{temporal_aggregate.1} parent=31 // pred_fallthru
        _
    $region32: #{temporal_aggregate.1} parent=5 // pred_fallthru
      _
    %p2576 = scmp.le.s32.totalorder 2, %s9
    // Predicated region
    $region37: #{temporal_aggregate.1} parent=5 // pred_check
      %p2577 = pneg %p2576
    $region38: #{temporal_aggregate.1} parent=5 // pred_check_branch
      %2579 = sbr.rel (%p2577) target = $region40
    $region39: #{temporal_aggregate.1} parent=5 // pred_region
      %s2580 = ssub.s32 %s9, 2
      // Predicated region
      $region41: #{temporal_aggregate.1} parent=39 // pred_check
        %p2581 = pneg %p106
      $region42: #{temporal_aggregate.1} parent=39 // pred_check_branch
        %2583 = sbr.rel (%p2581) target = $region44
      $region43: #{temporal_aggregate.1} parent=39 // pred_region
        %p2584 = scmp.lt.s32.totalorder %s15, 1
        %s2585 = scalar_select %p2584, %s15, 1
        %s2586 = smul.addr %s2585, 8
        %s2587 = smul.addr %s2586, 8
        %s2588 = scalar_lea.vmem %s3, %s2587
      $region44: #{temporal_aggregate.1} parent=39 // pred_fallthru
        _
    $region40: #{temporal_aggregate.1} parent=5 // pred_fallthru
      _
  $region6: #{temporal_aggregate.1} parent=0 // loop_footer
    %s13 = sadd.s32 1, %s9
  $region7: #{temporal_aggregate.1} parent=0 // loop_footer_branch
    %8 = sbr.rel target = $region3
  $region8: #{temporal_aggregate.1} parent=0 // loop_exit
    _

</llo_original>
